<compile_context>
chip_gen: v6e
topology: v6e:2x2x1
jax: 0.10.0
libtpu: 0.0.40
codegen_flags: <defaults>
</compile_context>

<pallas_src>
import math
import functools

import jax
import jax.numpy as jnp
from jax.experimental import pallas as pl
from jax.experimental.pallas import tpu as pltpu


# ---------------------------------------------------------------------------
# Helpers
# ---------------------------------------------------------------------------

def _pick_tile(dim, target):
    """Largest tile <= target that divides `dim` and is a multiple of 8, else
    the full dimension (always legal)."""
    t = min(target, dim)
    if t >= dim:
        return dim
    t -= t % 8
    while t >= 8:
        if dim % t == 0:
            return t
        t -= 8
    return dim


@functools.lru_cache(maxsize=None)
def _vmem_limit_bytes():
    """Explicit scoped-VMEM budget: ~85% of the chip's VMEM capped at 100 MiB
    (~100 MiB on v5e/v6e's 128 MiB, ~54 MiB on v7x's 64 MiB)."""
    try:
        cap = pltpu.get_tpu_info().vmem_capacity_bytes
        return int(min(100 * 1024 * 1024, cap * 0.85))
    except Exception:
        return 64 * 1024 * 1024


def _cparams(dimension_semantics):
    return pltpu.CompilerParams(dimension_semantics=dimension_semantics,
                                vmem_limit_bytes=_vmem_limit_bytes())


# ---------------------------------------------------------------------------
# Pallas kernels
# ---------------------------------------------------------------------------

def _qkv_proj_kernel(x_ref, w_ref, b_ref, q_ref, k_ref, v_ref,
                     *, d_model, num_heads, scale):
    """Fused QKV projection for one (batch, seq-tile) block, emitting Q/K/V
    head-major.  The 1/sqrt(d_k) scale is folded into Q here (once per row).
    The head split / relayout happens exactly once here, never in the flash
    inner loop."""
    d_k = d_model // num_heads
    x = x_ref[...].astype(w_ref.dtype)                  # (ts, D) bf16
    h = jnp.dot(x, w_ref[...],
                preferred_element_type=jnp.float32) + b_ref[...]   # (ts, 3D) f32
    q = h[:, :d_model] * scale
    k = h[:, d_model:2 * d_model]
    v = h[:, 2 * d_model:]
    for hh in range(num_heads):
        sl = slice(hh * d_k, (hh + 1) * d_k)
        q_ref[hh] = q[:, sl].astype(q_ref.dtype)
        k_ref[hh] = k[:, sl].astype(k_ref.dtype)
        v_ref[hh] = v[:, sl].astype(v_ref.dtype)


def _flash_mha_kernel(q_ref, k_ref, v_ref, wo_ref, bo_ref, o_ref,
                      m_sc, l_sc, acc_sc, out_sc):
    """Online-softmax attention.  grid = (B, q tiles, H, kv tiles); head and
    kv axes are reductions.  Per head: flash accumulation into (tq, d_k)
    scratch; at the last kv step the head's contribution of the fused output
    projection, (acc/l) @ Wo[h], is added into a lane-dense (tq, D)
    accumulator; the last head adds bo and writes the output tile."""
    hi = pl.program_id(2)
    ki = pl.program_id(3)
    nh = pl.num_programs(2)
    nk = pl.num_programs(3)

    @pl.when(ki == 0)
    def _init_head():
        m_sc[...] = jnp.full_like(m_sc, -jnp.inf)
        l_sc[...] = jnp.zeros_like(l_sc)
        acc_sc[...] = jnp.zeros_like(acc_sc)

    @pl.when((hi == 0) & (ki == 0))
    def _init_out():
        out_sc[...] = jnp.zeros_like(out_sc)

    q = q_ref[...]                                       # (tq, dk) bf16, pre-scaled
    k = k_ref[...]                                       # (tk, dk) bf16
    v = v_ref[...]                                       # (tk, dk) bf16

    s = jax.lax.dot_general(q, k, (((1,), (1,)), ((), ())),
                            preferred_element_type=jnp.float32)     # (tq, tk)
    m_prev = m_sc[...]
    m_new = jnp.maximum(m_prev, jnp.max(s, axis=-1, keepdims=True))
    alpha = jnp.exp(m_prev - m_new)
    p = jnp.exp(s - m_new)
    l_sc[...] = alpha * l_sc[...] + jnp.sum(p, axis=-1, keepdims=True)
    acc_sc[...] = alpha * acc_sc[...] + jnp.dot(
        p.astype(v.dtype), v, preferred_element_type=jnp.float32)
    m_sc[...] = m_new

    @pl.when(ki == nk - 1)
    def _head_epilogue():
        inv_l = pl.reciprocal(l_sc[...], approx=True)    # EUP slot, ~free
        head_out = (acc_sc[...] * inv_l).astype(wo_ref.dtype)       # (tq, dk)
        out_sc[...] += jnp.dot(head_out, wo_ref[...],
                               preferred_element_type=jnp.float32)  # (tq, D)

    @pl.when((hi == nh - 1) & (ki == nk - 1))
    def _finalize():
        o_ref[...] = (out_sc[...] + bo_ref[...]).astype(o_ref.dtype)


def _ffn_kernel(x_ref, w1_ref, b1_ref, w2_ref, b2_ref, g_ref, beta_ref, o_ref,
                *, eps):
    """layernorm(relu(x @ w1 + b1) @ w2 + b2 + x) for one row tile; matmuls in
    bf16 with f32 accumulation, residual/statistics in f32."""
    x = x_ref[...]                                       # (tm, D)
    h = jnp.maximum(
        jnp.dot(x.astype(w1_ref.dtype), w1_ref[...],
                preferred_element_type=jnp.float32) + b1_ref[...], 0.0)
    y = (jnp.dot(h.astype(w2_ref.dtype), w2_ref[...],
                 preferred_element_type=jnp.float32)
         + b2_ref[...] + x.astype(jnp.float32))
    mean = jnp.mean(y, axis=-1, keepdims=True)
    var = jnp.mean(jnp.square(y - mean), axis=-1, keepdims=True)
    normed = (y - mean) * jax.lax.rsqrt(var + eps)
    o_ref[...] = (normed * g_ref[...] + beta_ref[...]).astype(o_ref.dtype)


# ---------------------------------------------------------------------------
# pallas_call wrappers
# ---------------------------------------------------------------------------

def qkv_projection(x, wqkv, bqkv, *, num_heads, scale, block_s=256,
                   out_dtype=jnp.bfloat16):
    """x: [B, S, D], wqkv: [D, 3D] (bf16), bqkv: [3D] ->
       (q, k, v), each head-major [B, H, S, d_k] in `out_dtype` (Q pre-scaled)."""
    B, S, D = x.shape
    d_k = D // num_heads
    ts = _pick_tile(S, block_s)
    kernel = functools.partial(_qkv_proj_kernel, d_model=D,
                               num_heads=num_heads, scale=scale)
    qkv_shape = jax.ShapeDtypeStruct((B, num_heads, S, d_k), out_dtype)
    qkv_spec = pl.BlockSpec((None, num_heads, ts, d_k),
                            lambda b, si: (b, 0, si, 0))
    return pl.pallas_call(
        kernel,
        grid=(B, S // ts),
        out_shape=(qkv_shape, qkv_shape, qkv_shape),
        in_specs=[
            pl.BlockSpec((None, ts, D), lambda b, si: (b, si, 0)),  # activations
            pl.BlockSpec((D, 3 * D), lambda b, si: (0, 0)),         # weights resident
            pl.BlockSpec((1, 3 * D), lambda b, si: (0, 0)),         # bias resident
        ],
        out_specs=(qkv_spec, qkv_spec, qkv_spec),
        compiler_params=_cparams(("parallel", "parallel")),
    )(x, wqkv, bqkv.reshape(1, 3 * D))


def flash_mha(q, k, v, wo, bo, *, block_q=256, block_k=512,
              out_dtype=jnp.float32):
    """q/k/v: head-major [B, H, S, d_k] (Q pre-scaled); wo: [D, D] (bf16);
    returns [B, S, D] = (softmax(QK^T) V merged over heads) @ Wo + bo."""
    B, H, S, d_k = q.shape
    D = H * d_k
    tq = _pick_tile(S, block_q)
    tk = _pick_tile(S, block_k)
    wo_heads = wo.reshape(H, d_k, D)        # per-head slab of the projection
    return pl.pallas_call(
        _flash_mha_kernel,
        grid=(B, S // tq, H, S // tk),
        out_shape=jax.ShapeDtypeStruct((B, S, D), out_dtype),
        in_specs=[
            pl.BlockSpec((None, None, tq, d_k),
                         lambda b, qi, hi, ki: (b, hi, qi, 0)),
            pl.BlockSpec((None, None, tk, d_k),
                         lambda b, qi, hi, ki: (b, hi, ki, 0)),
            pl.BlockSpec((None, None, tk, d_k),
                         lambda b, qi, hi, ki: (b, hi, ki, 0)),
            pl.BlockSpec((None, d_k, D),
                         lambda b, qi, hi, ki: (hi, 0, 0)),    # Wo[h] resident
            pl.BlockSpec((1, D), lambda b, qi, hi, ki: (0, 0)),  # bo resident
        ],
        out_specs=pl.BlockSpec((None, tq, D), lambda b, qi, hi, ki: (b, qi, 0)),
        scratch_shapes=[
            pltpu.VMEM((tq, 1), jnp.float32),      # running max (per head)
            pltpu.VMEM((tq, 1), jnp.float32),      # running sum (per head)
            pltpu.VMEM((tq, d_k), jnp.float32),    # per-head PV accumulator
            pltpu.VMEM((tq, D), jnp.float32),      # fused Wo output accumulator
        ],
        compiler_params=_cparams(
            ("parallel", "parallel", "arbitrary", "arbitrary")),
    )(q, k, v, wo_heads, bo.reshape(1, D))


def ffn_layernorm(x2d, w1, b1, w2, b2, gamma, beta, *, eps=1e-5, block_m=512):
    """x2d: [M, D] -> [M, D]: LayerNorm(ReLU(x@w1+b1)@w2+b2 + x)."""
    M, D = x2d.shape
    Dff = w1.shape[1]
    tm = _pick_tile(M, block_m)
    kernel = functools.partial(_ffn_kernel, eps=eps)
    return pl.pallas_call(
        kernel,
        grid=(M // tm,),
        out_shape=jax.ShapeDtypeStruct((M, D), x2d.dtype),
        in_specs=[
            pl.BlockSpec((tm, D), lambda i: (i, 0)),       # activations: tiled
            pl.BlockSpec((D, Dff), lambda i: (0, 0)),      # weights: resident
            pl.BlockSpec((1, Dff), lambda i: (0, 0)),
            pl.BlockSpec((Dff, D), lambda i: (0, 0)),
            pl.BlockSpec((1, D), lambda i: (0, 0)),
            pl.BlockSpec((1, D), lambda i: (0, 0)),
            pl.BlockSpec((1, D), lambda i: (0, 0)),
        ],
        out_specs=pl.BlockSpec((tm, D), lambda i: (i, 0)),
        compiler_params=_cparams(("parallel",)),
    )(x2d, w1, b1.reshape(1, Dff), w2, b2.reshape(1, D),
      gamma.reshape(1, D), beta.reshape(1, D))


# ---------------------------------------------------------------------------
# Layer composition
# ---------------------------------------------------------------------------

def transformer_encoder_layer(src, params, *, num_heads,
                              block_s=256, block_q=256, block_k=512,
                              block_m=512):
    """src: [B, S, D] -> [B, S, D] (eval-mode forward of the PyTorch module)."""
    B, S, D = src.shape
    d_k = D // num_heads
    scale = 1.0 / math.sqrt(d_k)
    bf16 = jnp.bfloat16

    # Fused QKV projection -> head-major bf16 Q/K/V, scale folded into Q.
    q, k, v = qkv_projection(src, params["wqkv"].astype(bf16), params["bqkv"],
                             num_heads=num_heads, scale=scale, block_s=block_s)

    # Flash-style self-attention with the output projection fused in.
    attn_out = flash_mha(q, k, v, params["wo"].astype(bf16), params["bo"],
                         block_q=block_q, block_k=block_k,
                         out_dtype=jnp.float32)

    # FFN + residual + LayerNorm (fused, tiled over rows).
    ff = params["ffn"]
    out = ffn_layernorm(attn_out.reshape(B * S, D),
                        ff["w1"].astype(bf16), ff["b1"],
                        ff["w2"].astype(bf16), ff["b2"],
                        ff["gamma"], ff["beta"], block_m=block_m)
    return out.reshape(B, S, D).astype(src.dtype)


# ---------------------------------------------------------------------------
# Deterministic parameter init
# ---------------------------------------------------------------------------

def init_params(key, d_model, num_heads, d_ff):
    def dense(k, din, dout, scale=0.02):
        kw, kb = jax.random.split(k)
        w = jax.random.normal(kw, (din, dout), jnp.float32) * scale
        b = jax.random.normal(kb, (dout,), jnp.float32) * scale
        return w, b

    keys = jax.random.split(key, 6)
    wq, bq = dense(keys[0], d_model, d_model)
    wk, bk = dense(keys[1], d_model, d_model)
    wv, bv = dense(keys[2], d_model, d_model)
    wo, bo = dense(keys[3], d_model, d_model)
    w1, b1 = dense(keys[4], d_model, d_ff)
    w2, b2 = dense(keys[5], d_ff, d_model)
    return dict(
        wqkv=jnp.concatenate([wq, wk, wv], axis=1),   # [D, 3D] fused QKV weight
        bqkv=jnp.concatenate([bq, bk, bv], axis=0),   # [3D]
        wo=wo, bo=bo,
        ffn=dict(w1=w1, b1=b1, w2=w2, b2=b2,
                 gamma=jnp.ones((d_model,), jnp.float32),
                 beta=jnp.zeros((d_model,), jnp.float32)),
    )


# ---------------------------------------------------------------------------
# Pure-JAX reference (for numerical sanity check)
# ---------------------------------------------------------------------------

def _reference_layer(src, params, num_heads, eps=1e-5):
    B, S, D = src.shape
    dk = D // num_heads
    x2 = src.reshape(B * S, D)
    qkv = x2 @ params["wqkv"] + params["bqkv"]
    q, k, v = jnp.split(qkv, 3, axis=-1)

    def heads(t):
        return t.reshape(B, S, num_heads, dk).transpose(0, 2, 1, 3)

    q, k, v = heads(q), heads(k), heads(v)
    scores = jnp.einsum("bhqd,bhkd->bhqk", q, k) / math.sqrt(dk)
    attn = jax.nn.softmax(scores, axis=-1)
    o = jnp.einsum("bhqk,bhkd->bhqd", attn, v)
    o = o.transpose(0, 2, 1, 3).reshape(B * S, D)
    o = o @ params["wo"] + params["bo"]
    ff = params["ffn"]
    h = jax.nn.relu(o @ ff["w1"] + ff["b1"])
    y = h @ ff["w2"] + ff["b2"] + o
    mean = y.mean(-1, keepdims=True)
    var = ((y - mean) ** 2).mean(-1, keepdims=True)
    y = (y - mean) * jax.lax.rsqrt(var + eps) * ff["gamma"] + ff["beta"]
    return y.reshape(B, S, D)


# ---------------------------------------------------------------------------

if __name__ == "__main__":
    B, S, D_MODEL, NUM_HEADS, D_FF = 2, 16, 32, 4, 64

    key = jax.random.PRNGKey(0)
    k_src, k_par = jax.random.split(key)
    src = jax.random.normal(k_src, (B, S, D_MODEL), jnp.float32)
    params = init_params(k_par, D_MODEL, NUM_HEADS, D_FF)

    # Tiny tiles so the demo actually exercises the (B, Sq, H, Sk) / row grids.
    layer = jax.jit(functools.partial(
        transformer_encoder_layer, num_heads=NUM_HEADS,
        block_s=8, block_q=8, block_k=8, block_m=16))
    out = jax.block_until_ready(layer(src, params))

    assert out.shape == (B, S, D_MODEL)
    assert bool(jnp.all(jnp.isfinite(out)))

    ref = _reference_layer(src, params, NUM_HEADS)
    max_err = float(jnp.max(jnp.abs(out - ref)))
    assert max_err < 5e-2, f"max abs error vs reference: {max_err}"

    print("KERNEL_OK")
</pallas_src>

<mosaic_0001>
module attributes {stable_mosaic.version = 11 : i64} {
  func.func @_qkv_proj_kernel(%arg0: i32, %arg1: i32, %arg2: memref<1x8x32xf32, #tpu.memory_space<vmem>>, %arg3: memref<32x96xbf16, #tpu.memory_space<vmem>>, %arg4: memref<1x96xf32, #tpu.memory_space<vmem>>, %arg5: memref<1x4x8x8xbf16, #tpu.memory_space<vmem>>, %arg6: memref<1x4x8x8xbf16, #tpu.memory_space<vmem>>, %arg7: memref<1x4x8x8xbf16, #tpu.memory_space<vmem>>) attributes {dimension_semantics = [#tpu.dimension_semantics<parallel>, #tpu.dimension_semantics<parallel>], iteration_bounds = array<i64: 2, 2>, scalar_prefetch = 0 : i64, scratch_operands = 0 : i64, tpu.core_type = #tpu.core_type<tc>, window_params = [{transform_indices = @transform_0, window_bounds = array<i64: 1, 8, 32>}, {pipeline_mode = #tpu.pipeline_mode<synchronous>, transform_indices = @transform_1, window_bounds = array<i64: 32, 96>}, {pipeline_mode = #tpu.pipeline_mode<synchronous>, transform_indices = @transform_2, window_bounds = array<i64: 1, 96>}, {transform_indices = @transform_3, window_bounds = array<i64: 1, 4, 8, 8>}, {transform_indices = @transform_4, window_bounds = array<i64: 1, 4, 8, 8>}, {transform_indices = @transform_5, window_bounds = array<i64: 1, 4, 8, 8>}]} {
    %c0 = arith.constant 0 : index
    %c0_0 = arith.constant 0 : index
    %c0_1 = arith.constant 0 : index
    %0 = vector.load %arg2[%c0, %c0_0, %c0_1] : memref<1x8x32xf32, #tpu.memory_space<vmem>>, vector<1x8x32xf32>
    %1 = vector.shape_cast %0 : vector<1x8x32xf32> to vector<8x32xf32>
    %2 = arith.truncf %1 : vector<8x32xf32> to vector<8x32xbf16>
    %c0_2 = arith.constant 0 : index
    %c0_3 = arith.constant 0 : index
    %3 = vector.load %arg3[%c0_2, %c0_3] : memref<32x96xbf16, #tpu.memory_space<vmem>>, vector<32x96xbf16>
    %cst = arith.constant dense<0.000000e+00> : vector<8x96xf32>
    %4 = tpu.matmul %2, %3, %cst {dimension_numbers = #tpu.dot_dimension_numbers<[1], [0], [0], [1], [0, 0, 1, 1], [], []>} : vector<8x32xbf16>, vector<32x96xbf16>, vector<8x96xf32> -> vector<8x96xf32>
    %c0_4 = arith.constant 0 : index
    %c0_5 = arith.constant 0 : index
    %5 = vector.load %arg4[%c0_4, %c0_5] : memref<1x96xf32, #tpu.memory_space<vmem>>, vector<1x96xf32>
    %6 = vector.broadcast %5 : vector<1x96xf32> to vector<8x96xf32>
    %7 = arith.addf %4, %6 : vector<8x96xf32>
    %8 = vector.extract_strided_slice %7 {offsets = [0, 0], sizes = [8, 32], strides = [1, 1]} : vector<8x96xf32> to vector<8x32xf32>
    %cst_6 = arith.constant 0.353553385 : f32
    %9 = vector.broadcast %cst_6 : f32 to vector<8x32xf32>
    %10 = arith.mulf %8, %9 : vector<8x32xf32>
    %11 = vector.extract_strided_slice %7 {offsets = [0, 32], sizes = [8, 32], strides = [1, 1]} : vector<8x96xf32> to vector<8x32xf32>
    %12 = vector.extract_strided_slice %7 {offsets = [0, 64], sizes = [8, 32], strides = [1, 1]} : vector<8x96xf32> to vector<8x32xf32>
    %13 = vector.extract_strided_slice %10 {offsets = [0, 0], sizes = [8, 8], strides = [1, 1]} : vector<8x32xf32> to vector<8x8xf32>
    %14 = arith.truncf %13 : vector<8x8xf32> to vector<8x8xbf16>
    %c0_7 = arith.constant 0 : index
    %c0_8 = arith.constant 0 : index
    %c0_9 = arith.constant 0 : index
    %c0_10 = arith.constant 0 : index
    %15 = vector.load %arg5[%c0_7, %c0_8, %c0_9, %c0_10] : memref<1x4x8x8xbf16, #tpu.memory_space<vmem>>, vector<1x1x8x8xbf16>
    %16 = vector.shape_cast %15 : vector<1x1x8x8xbf16> to vector<8x8xbf16>
    %17 = vector.shape_cast %14 : vector<8x8xbf16> to vector<1x1x8x8xbf16>
    tpu.vector_store %arg5[%c0_7, %c0_8, %c0_9, %c0_10], %17 {strides = array<i32>} : memref<1x4x8x8xbf16, #tpu.memory_space<vmem>>, vector<1x1x8x8xbf16>,
    %18 = vector.extract_strided_slice %11 {offsets = [0, 0], sizes = [8, 8], strides = [1, 1]} : vector<8x32xf32> to vector<8x8xf32>
    %19 = arith.truncf %18 : vector<8x8xf32> to vector<8x8xbf16>
    %c0_11 = arith.constant 0 : index
    %c0_12 = arith.constant 0 : index
    %c0_13 = arith.constant 0 : index
    %c0_14 = arith.constant 0 : index
    %20 = vector.load %arg6[%c0_11, %c0_12, %c0_13, %c0_14] : memref<1x4x8x8xbf16, #tpu.memory_space<vmem>>, vector<1x1x8x8xbf16>
    %21 = vector.shape_cast %20 : vector<1x1x8x8xbf16> to vector<8x8xbf16>
    %22 = vector.shape_cast %19 : vector<8x8xbf16> to vector<1x1x8x8xbf16>
    tpu.vector_store %arg6[%c0_11, %c0_12, %c0_13, %c0_14], %22 {strides = array<i32>} : memref<1x4x8x8xbf16, #tpu.memory_space<vmem>>, vector<1x1x8x8xbf16>,
    %23 = vector.extract_strided_slice %12 {offsets = [0, 0], sizes = [8, 8], strides = [1, 1]} : vector<8x32xf32> to vector<8x8xf32>
    %24 = arith.truncf %23 : vector<8x8xf32> to vector<8x8xbf16>
    %c0_15 = arith.constant 0 : index
    %c0_16 = arith.constant 0 : index
    %c0_17 = arith.constant 0 : index
    %c0_18 = arith.constant 0 : index
    %25 = vector.load %arg7[%c0_15, %c0_16, %c0_17, %c0_18] : memref<1x4x8x8xbf16, #tpu.memory_space<vmem>>, vector<1x1x8x8xbf16>
    %26 = vector.shape_cast %25 : vector<1x1x8x8xbf16> to vector<8x8xbf16>
    %27 = vector.shape_cast %24 : vector<8x8xbf16> to vector<1x1x8x8xbf16>
    tpu.vector_store %arg7[%c0_15, %c0_16, %c0_17, %c0_18], %27 {strides = array<i32>} : memref<1x4x8x8xbf16, #tpu.memory_space<vmem>>, vector<1x1x8x8xbf16>,
    %28 = vector.extract_strided_slice %10 {offsets = [0, 8], sizes = [8, 8], strides = [1, 1]} : vector<8x32xf32> to vector<8x8xf32>
    %29 = arith.truncf %28 : vector<8x8xf32> to vector<8x8xbf16>
    %c0_19 = arith.constant 0 : index
    %c1 = arith.constant 1 : index
    %c0_20 = arith.constant 0 : index
    %c0_21 = arith.constant 0 : index
    %30 = vector.load %arg5[%c0_19, %c1, %c0_20, %c0_21] : memref<1x4x8x8xbf16, #tpu.memory_space<vmem>>, vector<1x1x8x8xbf16>
    %31 = vector.shape_cast %30 : vector<1x1x8x8xbf16> to vector<8x8xbf16>
    %32 = vector.shape_cast %29 : vector<8x8xbf16> to vector<1x1x8x8xbf16>
    tpu.vector_store %arg5[%c0_19, %c1, %c0_20, %c0_21], %32 {strides = array<i32>} : memref<1x4x8x8xbf16, #tpu.memory_space<vmem>>, vector<1x1x8x8xbf16>,
    %33 = vector.extract_strided_slice %11 {offsets = [0, 8], sizes = [8, 8], strides = [1, 1]} : vector<8x32xf32> to vector<8x8xf32>
    %34 = arith.truncf %33 : vector<8x8xf32> to vector<8x8xbf16>
    %c0_22 = arith.constant 0 : index
    %c1_23 = arith.constant 1 : index
    %c0_24 = arith.constant 0 : index
    %c0_25 = arith.constant 0 : index
    %35 = vector.load %arg6[%c0_22, %c1_23, %c0_24, %c0_25] : memref<1x4x8x8xbf16, #tpu.memory_space<vmem>>, vector<1x1x8x8xbf16>
    %36 = vector.shape_cast %35 : vector<1x1x8x8xbf16> to vector<8x8xbf16>
    %37 = vector.shape_cast %34 : vector<8x8xbf16> to vector<1x1x8x8xbf16>
    tpu.vector_store %arg6[%c0_22, %c1_23, %c0_24, %c0_25], %37 {strides = array<i32>} : memref<1x4x8x8xbf16, #tpu.memory_space<vmem>>, vector<1x1x8x8xbf16>,
    %38 = vector.extract_strided_slice %12 {offsets = [0, 8], sizes = [8, 8], strides = [1, 1]} : vector<8x32xf32> to vector<8x8xf32>
    %39 = arith.truncf %38 : vector<8x8xf32> to vector<8x8xbf16>
    %c0_26 = arith.constant 0 : index
    %c1_27 = arith.constant 1 : index
    %c0_28 = arith.constant 0 : index
    %c0_29 = arith.constant 0 : index
    %40 = vector.load %arg7[%c0_26, %c1_27, %c0_28, %c0_29] : memref<1x4x8x8xbf16, #tpu.memory_space<vmem>>, vector<1x1x8x8xbf16>
    %41 = vector.shape_cast %40 : vector<1x1x8x8xbf16> to vector<8x8xbf16>
    %42 = vector.shape_cast %39 : vector<8x8xbf16> to vector<1x1x8x8xbf16>
    tpu.vector_store %arg7[%c0_26, %c1_27, %c0_28, %c0_29], %42 {strides = array<i32>} : memref<1x4x8x8xbf16, #tpu.memory_space<vmem>>, vector<1x1x8x8xbf16>,
    %43 = vector.extract_strided_slice %10 {offsets = [0, 16], sizes = [8, 8], strides = [1, 1]} : vector<8x32xf32> to vector<8x8xf32>
    %44 = arith.truncf %43 : vector<8x8xf32> to vector<8x8xbf16>
    %c0_30 = arith.constant 0 : index
    %c2 = arith.constant 2 : index
    %c0_31 = arith.constant 0 : index
    %c0_32 = arith.constant 0 : index
    %45 = vector.load %arg5[%c0_30, %c2, %c0_31, %c0_32] : memref<1x4x8x8xbf16, #tpu.memory_space<vmem>>, vector<1x1x8x8xbf16>
    %46 = vector.shape_cast %45 : vector<1x1x8x8xbf16> to vector<8x8xbf16>
    %47 = vector.shape_cast %44 : vector<8x8xbf16> to vector<1x1x8x8xbf16>
    tpu.vector_store %arg5[%c0_30, %c2, %c0_31, %c0_32], %47 {strides = array<i32>} : memref<1x4x8x8xbf16, #tpu.memory_space<vmem>>, vector<1x1x8x8xbf16>,
    %48 = vector.extract_strided_slice %11 {offsets = [0, 16], sizes = [8, 8], strides = [1, 1]} : vector<8x32xf32> to vector<8x8xf32>
    %49 = arith.truncf %48 : vector<8x8xf32> to vector<8x8xbf16>
    %c0_33 = arith.constant 0 : index
    %c2_34 = arith.constant 2 : index
    %c0_35 = arith.constant 0 : index
    %c0_36 = arith.constant 0 : index
    %50 = vector.load %arg6[%c0_33, %c2_34, %c0_35, %c0_36] : memref<1x4x8x8xbf16, #tpu.memory_space<vmem>>, vector<1x1x8x8xbf16>
    %51 = vector.shape_cast %50 : vector<1x1x8x8xbf16> to vector<8x8xbf16>
    %52 = vector.shape_cast %49 : vector<8x8xbf16> to vector<1x1x8x8xbf16>
    tpu.vector_store %arg6[%c0_33, %c2_34, %c0_35, %c0_36], %52 {strides = array<i32>} : memref<1x4x8x8xbf16, #tpu.memory_space<vmem>>, vector<1x1x8x8xbf16>,
    %53 = vector.extract_strided_slice %12 {offsets = [0, 16], sizes = [8, 8], strides = [1, 1]} : vector<8x32xf32> to vector<8x8xf32>
    %54 = arith.truncf %53 : vector<8x8xf32> to vector<8x8xbf16>
    %c0_37 = arith.constant 0 : index
    %c2_38 = arith.constant 2 : index
    %c0_39 = arith.constant 0 : index
    %c0_40 = arith.constant 0 : index
    %55 = vector.load %arg7[%c0_37, %c2_38, %c0_39, %c0_40] : memref<1x4x8x8xbf16, #tpu.memory_space<vmem>>, vector<1x1x8x8xbf16>
    %56 = vector.shape_cast %55 : vector<1x1x8x8xbf16> to vector<8x8xbf16>
    %57 = vector.shape_cast %54 : vector<8x8xbf16> to vector<1x1x8x8xbf16>
    tpu.vector_store %arg7[%c0_37, %c2_38, %c0_39, %c0_40], %57 {strides = array<i32>} : memref<1x4x8x8xbf16, #tpu.memory_space<vmem>>, vector<1x1x8x8xbf16>,
    %58 = vector.extract_strided_slice %10 {offsets = [0, 24], sizes = [8, 8], strides = [1, 1]} : vector<8x32xf32> to vector<8x8xf32>
    %59 = arith.truncf %58 : vector<8x8xf32> to vector<8x8xbf16>
    %c0_41 = arith.constant 0 : index
    %c3 = arith.constant 3 : index
    %c0_42 = arith.constant 0 : index
    %c0_43 = arith.constant 0 : index
    %60 = vector.load %arg5[%c0_41, %c3, %c0_42, %c0_43] : memref<1x4x8x8xbf16, #tpu.memory_space<vmem>>, vector<1x1x8x8xbf16>
    %61 = vector.shape_cast %60 : vector<1x1x8x8xbf16> to vector<8x8xbf16>
    %62 = vector.shape_cast %59 : vector<8x8xbf16> to vector<1x1x8x8xbf16>
    tpu.vector_store %arg5[%c0_41, %c3, %c0_42, %c0_43], %62 {strides = array<i32>} : memref<1x4x8x8xbf16, #tpu.memory_space<vmem>>, vector<1x1x8x8xbf16>,
    %63 = vector.extract_strided_slice %11 {offsets = [0, 24], sizes = [8, 8], strides = [1, 1]} : vector<8x32xf32> to vector<8x8xf32>
    %64 = arith.truncf %63 : vector<8x8xf32> to vector<8x8xbf16>
    %c0_44 = arith.constant 0 : index
    %c3_45 = arith.constant 3 : index
    %c0_46 = arith.constant 0 : index
    %c0_47 = arith.constant 0 : index
    %65 = vector.load %arg6[%c0_44, %c3_45, %c0_46, %c0_47] : memref<1x4x8x8xbf16, #tpu.memory_space<vmem>>, vector<1x1x8x8xbf16>
    %66 = vector.shape_cast %65 : vector<1x1x8x8xbf16> to vector<8x8xbf16>
    %67 = vector.shape_cast %64 : vector<8x8xbf16> to vector<1x1x8x8xbf16>
    tpu.vector_store %arg6[%c0_44, %c3_45, %c0_46, %c0_47], %67 {strides = array<i32>} : memref<1x4x8x8xbf16, #tpu.memory_space<vmem>>, vector<1x1x8x8xbf16>,
    %68 = vector.extract_strided_slice %12 {offsets = [0, 24], sizes = [8, 8], strides = [1, 1]} : vector<8x32xf32> to vector<8x8xf32>
    %69 = arith.truncf %68 : vector<8x8xf32> to vector<8x8xbf16>
    %c0_48 = arith.constant 0 : index
    %c3_49 = arith.constant 3 : index
    %c0_50 = arith.constant 0 : index
    %c0_51 = arith.constant 0 : index
    %70 = vector.load %arg7[%c0_48, %c3_49, %c0_50, %c0_51] : memref<1x4x8x8xbf16, #tpu.memory_space<vmem>>, vector<1x1x8x8xbf16>
    %71 = vector.shape_cast %70 : vector<1x1x8x8xbf16> to vector<8x8xbf16>
    %72 = vector.shape_cast %69 : vector<8x8xbf16> to vector<1x1x8x8xbf16>
    tpu.vector_store %arg7[%c0_48, %c3_49, %c0_50, %c0_51], %72 {strides = array<i32>} : memref<1x4x8x8xbf16, #tpu.memory_space<vmem>>, vector<1x1x8x8xbf16>,
    return
  }
  func.func @transform_0(%arg0: i32, %arg1: i32) -> (i32, i32, i32) {
    %c0_i32 = arith.constant 0 : i32
    %c0_i32_0 = arith.constant 0 : i32
    return %arg0, %arg1, %c0_i32 : i32, i32, i32
  }
  func.func @transform_1(%arg0: i32, %arg1: i32) -> (i32, i32) {
    %c0_i32 = arith.constant 0 : i32
    %c0_i32_0 = arith.constant 0 : i32
    %c0_i32_1 = arith.constant 0 : i32
    return %c0_i32, %c0_i32_0 : i32, i32
  }
  func.func @transform_2(%arg0: i32, %arg1: i32) -> (i32, i32) {
    %c0_i32 = arith.constant 0 : i32
    %c0_i32_0 = arith.constant 0 : i32
    %c0_i32_1 = arith.constant 0 : i32
    return %c0_i32, %c0_i32_0 : i32, i32
  }
  func.func @transform_3(%arg0: i32, %arg1: i32) -> (i32, i32, i32, i32) {
    %c0_i32 = arith.constant 0 : i32
    %c0_i32_0 = arith.constant 0 : i32
    %c0_i32_1 = arith.constant 0 : i32
    return %arg0, %c0_i32, %arg1, %c0_i32_0 : i32, i32, i32, i32
  }
  func.func @transform_4(%arg0: i32, %arg1: i32) -> (i32, i32, i32, i32) {
    %c0_i32 = arith.constant 0 : i32
    %c0_i32_0 = arith.constant 0 : i32
    %c0_i32_1 = arith.constant 0 : i32
    return %arg0, %c0_i32, %arg1, %c0_i32_0 : i32, i32, i32, i32
  }
  func.func @transform_5(%arg0: i32, %arg1: i32) -> (i32, i32, i32, i32) {
    %c0_i32 = arith.constant 0 : i32
    %c0_i32_0 = arith.constant 0 : i32
    %c0_i32_1 = arith.constant 0 : i32
    return %arg0, %c0_i32, %arg1, %c0_i32_0 : i32, i32, i32, i32
  }
}

module attributes {stable_mosaic.version = 11 : i64} {
  func.func @_flash_mha_kernel(%arg0: i32, %arg1: i32, %arg2: i32, %arg3: i32, %arg4: memref<1x1x8x8xbf16, #tpu.memory_space<vmem>>, %arg5: memref<1x1x8x8xbf16, #tpu.memory_space<vmem>>, %arg6: memref<1x1x8x8xbf16, #tpu.memory_space<vmem>>, %arg7: memref<1x8x32xbf16, #tpu.memory_space<vmem>>, %arg8: memref<1x32xf32, #tpu.memory_space<vmem>>, %arg9: memref<1x8x32xf32, #tpu.memory_space<vmem>>, %arg10: memref<8x1xf32, #tpu.memory_space<vmem>>, %arg11: memref<8x1xf32, #tpu.memory_space<vmem>>, %arg12: memref<8x8xf32, #tpu.memory_space<vmem>>, %arg13: memref<8x32xf32, #tpu.memory_space<vmem>>) attributes {dimension_semantics = [#tpu.dimension_semantics<parallel>, #tpu.dimension_semantics<parallel>, #tpu.dimension_semantics<arbitrary>, #tpu.dimension_semantics<arbitrary>], iteration_bounds = array<i64: 2, 2, 4, 2>, scalar_prefetch = 0 : i64, scratch_operands = 4 : i64, tpu.core_type = #tpu.core_type<tc>, window_params = [{transform_indices = @transform_0, window_bounds = array<i64: 1, 1, 8, 8>}, {transform_indices = @transform_1, window_bounds = array<i64: 1, 1, 8, 8>}, {transform_indices = @transform_2, window_bounds = array<i64: 1, 1, 8, 8>}, {transform_indices = @transform_3, window_bounds = array<i64: 1, 8, 32>}, {pipeline_mode = #tpu.pipeline_mode<synchronous>, transform_indices = @transform_4, window_bounds = array<i64: 1, 32>}, {transform_indices = @transform_5, window_bounds = array<i64: 1, 8, 32>}]} {
    %c0_i32 = arith.constant 0 : i32
    %0 = arith.cmpi eq, %arg3, %c0_i32 : i32
    %1 = arith.extui %0 : i1 to i32
    %c0_i32_0 = arith.constant 0 : i32
    %2 = arith.cmpi ne, %1, %c0_i32_0 : i32
    scf.if %2 {
      %cst_33 = arith.constant 0xFF800000 : f32
      %46 = vector.broadcast %cst_33 : f32 to vector<8x1xf32>
      %c0_34 = arith.constant 0 : index
      %c0_35 = arith.constant 0 : index
      %47 = vector.load %arg10[%c0_34, %c0_35] : memref<8x1xf32, #tpu.memory_space<vmem>>, vector<8x1xf32>
      tpu.vector_store %arg10[%c0_34, %c0_35], %46 {strides = array<i32>} : memref<8x1xf32, #tpu.memory_space<vmem>>, vector<8x1xf32>,
      %cst_36 = arith.constant 0.000000e+00 : f32
      %48 = vector.broadcast %cst_36 : f32 to vector<8x1xf32>
      %c0_37 = arith.constant 0 : index
      %c0_38 = arith.constant 0 : index
      %49 = vector.load %arg11[%c0_37, %c0_38] : memref<8x1xf32, #tpu.memory_space<vmem>>, vector<8x1xf32>
      tpu.vector_store %arg11[%c0_37, %c0_38], %48 {strides = array<i32>} : memref<8x1xf32, #tpu.memory_space<vmem>>, vector<8x1xf32>,
      %cst_39 = arith.constant 0.000000e+00 : f32
      %50 = vector.broadcast %cst_39 : f32 to vector<8x8xf32>
      %c0_40 = arith.constant 0 : index
      %c0_41 = arith.constant 0 : index
      %51 = vector.load %arg12[%c0_40, %c0_41] : memref<8x8xf32, #tpu.memory_space<vmem>>, vector<8x8xf32>
      tpu.vector_store %arg12[%c0_40, %c0_41], %50 {strides = array<i32>} : memref<8x8xf32, #tpu.memory_space<vmem>>, vector<8x8xf32>,
    } else {
    }
    %c0_i32_1 = arith.constant 0 : i32
    %3 = arith.cmpi eq, %arg2, %c0_i32_1 : i32
    %c0_i32_2 = arith.constant 0 : i32
    %4 = arith.cmpi eq, %arg3, %c0_i32_2 : i32
    %5 = arith.andi %3, %4 : i1
    %6 = arith.extui %5 : i1 to i32
    %c0_i32_3 = arith.constant 0 : i32
    %7 = arith.cmpi ne, %6, %c0_i32_3 : i32
    scf.if %7 {
      %cst_33 = arith.constant 0.000000e+00 : f32
      %46 = vector.broadcast %cst_33 : f32 to vector<8x32xf32>
      %c0_34 = arith.constant 0 : index
      %c0_35 = arith.constant 0 : index
      %47 = vector.load %arg13[%c0_34, %c0_35] : memref<8x32xf32, #tpu.memory_space<vmem>>, vector<8x32xf32>
      tpu.vector_store %arg13[%c0_34, %c0_35], %46 {strides = array<i32>} : memref<8x32xf32, #tpu.memory_space<vmem>>, vector<8x32xf32>,
    } else {
    }
    %c0 = arith.constant 0 : index
    %c0_4 = arith.constant 0 : index
    %c0_5 = arith.constant 0 : index
    %c0_6 = arith.constant 0 : index
    %8 = vector.load %arg4[%c0, %c0_4, %c0_5, %c0_6] : memref<1x1x8x8xbf16, #tpu.memory_space<vmem>>, vector<1x1x8x8xbf16>
    %9 = vector.shape_cast %8 : vector<1x1x8x8xbf16> to vector<8x8xbf16>
    %c0_7 = arith.constant 0 : index
    %c0_8 = arith.constant 0 : index
    %c0_9 = arith.constant 0 : index
    %c0_10 = arith.constant 0 : index
    %10 = vector.load %arg5[%c0_7, %c0_8, %c0_9, %c0_10] : memref<1x1x8x8xbf16, #tpu.memory_space<vmem>>, vector<1x1x8x8xbf16>
    %11 = vector.shape_cast %10 : vector<1x1x8x8xbf16> to vector<8x8xbf16>
    %c0_11 = arith.constant 0 : index
    %c0_12 = arith.constant 0 : index
    %c0_13 = arith.constant 0 : index
    %c0_14 = arith.constant 0 : index
    %12 = vector.load %arg6[%c0_11, %c0_12, %c0_13, %c0_14] : memref<1x1x8x8xbf16, #tpu.memory_space<vmem>>, vector<1x1x8x8xbf16>
    %13 = vector.shape_cast %12 : vector<1x1x8x8xbf16> to vector<8x8xbf16>
    %cst = arith.constant dense<0.000000e+00> : vector<8x8xf32>
    %14 = tpu.matmul %9, %11, %cst {dimension_numbers = #tpu.dot_dimension_numbers<[1], [1], [0], [0], [0, 0, 1, 0], [], []>} : vector<8x8xbf16>, vector<8x8xbf16>, vector<8x8xf32> -> vector<8x8xf32>
    %c0_15 = arith.constant 0 : index
    %c0_16 = arith.constant 0 : index
    %15 = vector.load %arg10[%c0_15, %c0_16] : memref<8x1xf32, #tpu.memory_space<vmem>>, vector<8x1xf32>
    %cst_17 = arith.constant dense<0xFF800000> : vector<8xf32>
    %16 = vector.multi_reduction <maximumf>, %14, %cst_17 [1] : vector<8x8xf32> to vector<8xf32>
    %17 = vector.shape_cast %16 : vector<8xf32> to vector<8x1xf32>
    %18 = arith.maximumf %15, %17 : vector<8x1xf32>
    %19 = arith.subf %15, %18 : vector<8x1xf32>
    %20 = math.exp %19 : vector<8x1xf32>
    %21 = vector.broadcast %18 : vector<8x1xf32> to vector<8x8xf32>
    %22 = arith.subf %14, %21 : vector<8x8xf32>
    %23 = math.exp %22 : vector<8x8xf32>
    %c0_18 = arith.constant 0 : index
    %c0_19 = arith.constant 0 : index
    %24 = vector.load %arg11[%c0_18, %c0_19] : memref<8x1xf32, #tpu.memory_space<vmem>>, vector<8x1xf32>
    %25 = arith.mulf %20, %24 : vector<8x1xf32>
    %cst_20 = arith.constant dense<0.000000e+00> : vector<8xf32>
    %26 = vector.multi_reduction <add>, %23, %cst_20 [1] : vector<8x8xf32> to vector<8xf32>
    %27 = vector.shape_cast %26 : vector<8xf32> to vector<8x1xf32>
    %28 = arith.addf %25, %27 : vector<8x1xf32>
    %c0_21 = arith.constant 0 : index
    %c0_22 = arith.constant 0 : index
    %29 = vector.load %arg11[%c0_21, %c0_22] : memref<8x1xf32, #tpu.memory_space<vmem>>, vector<8x1xf32>
    tpu.vector_store %arg11[%c0_21, %c0_22], %28 {strides = array<i32>} : memref<8x1xf32, #tpu.memory_space<vmem>>, vector<8x1xf32>,
    %c0_23 = arith.constant 0 : index
    %c0_24 = arith.constant 0 : index
    %30 = vector.load %arg12[%c0_23, %c0_24] : memref<8x8xf32, #tpu.memory_space<vmem>>, vector<8x8xf32>
    %31 = vector.broadcast %20 : vector<8x1xf32> to vector<8x8xf32>
    %32 = arith.mulf %31, %30 : vector<8x8xf32>
    %33 = arith.truncf %23 : vector<8x8xf32> to vector<8x8xbf16>
    %cst_25 = arith.constant dense<0.000000e+00> : vector<8x8xf32>
    %34 = tpu.matmul %33, %13, %cst_25 {dimension_numbers = #tpu.dot_dimension_numbers<[1], [0], [0], [1], [0, 0, 1, 1], [], []>} : vector<8x8xbf16>, vector<8x8xbf16>, vector<8x8xf32> -> vector<8x8xf32>
    %35 = arith.addf %32, %34 : vector<8x8xf32>
    %c0_26 = arith.constant 0 : index
    %c0_27 = arith.constant 0 : index
    %36 = vector.load %arg12[%c0_26, %c0_27] : memref<8x8xf32, #tpu.memory_space<vmem>>, vector<8x8xf32>
    tpu.vector_store %arg12[%c0_26, %c0_27], %35 {strides = array<i32>} : memref<8x8xf32, #tpu.memory_space<vmem>>, vector<8x8xf32>,
    %c0_28 = arith.constant 0 : index
    %c0_29 = arith.constant 0 : index
    %37 = vector.load %arg10[%c0_28, %c0_29] : memref<8x1xf32, #tpu.memory_space<vmem>>, vector<8x1xf32>
    tpu.vector_store %arg10[%c0_28, %c0_29], %18 {strides = array<i32>} : memref<8x1xf32, #tpu.memory_space<vmem>>, vector<8x1xf32>,
    %c1_i32 = arith.constant 1 : i32
    %38 = arith.cmpi eq, %arg3, %c1_i32 : i32
    %39 = arith.extui %38 : i1 to i32
    %c0_i32_30 = arith.constant 0 : i32
    %40 = arith.cmpi ne, %39, %c0_i32_30 : i32
    scf.if %40 {
      %c0_33 = arith.constant 0 : index
      %c0_34 = arith.constant 0 : index
      %46 = vector.load %arg11[%c0_33, %c0_34] : memref<8x1xf32, #tpu.memory_space<vmem>>, vector<8x1xf32>
      %47 = tpu.reciprocal %46 {approx = true} : vector<8x1xf32> -> vector<8x1xf32>
      %c0_35 = arith.constant 0 : index
      %c0_36 = arith.constant 0 : index
      %48 = vector.load %arg12[%c0_35, %c0_36] : memref<8x8xf32, #tpu.memory_space<vmem>>, vector<8x8xf32>
      %49 = vector.broadcast %47 : vector<8x1xf32> to vector<8x8xf32>
      %50 = arith.mulf %48, %49 : vector<8x8xf32>
      %51 = arith.truncf %50 : vector<8x8xf32> to vector<8x8xbf16>
      %c0_37 = arith.constant 0 : index
      %c0_38 = arith.constant 0 : index
      %52 = vector.load %arg13[%c0_37, %c0_38] : memref<8x32xf32, #tpu.memory_space<vmem>>, vector<8x32xf32>
      %c0_39 = arith.constant 0 : index
      %c0_40 = arith.constant 0 : index
      %c0_41 = arith.constant 0 : index
      %53 = vector.load %arg7[%c0_39, %c0_40, %c0_41] : memref<1x8x32xbf16, #tpu.memory_space<vmem>>, vector<1x8x32xbf16>
      %54 = vector.shape_cast %53 : vector<1x8x32xbf16> to vector<8x32xbf16>
      %cst_42 = arith.constant dense<0.000000e+00> : vector<8x32xf32>
      %55 = tpu.matmul %51, %54, %cst_42 {dimension_numbers = #tpu.dot_dimension_numbers<[1], [0], [0], [1], [0, 0, 1, 1], [], []>} : vector<8x8xbf16>, vector<8x32xbf16>, vector<8x32xf32> -> vector<8x32xf32>
      %56 = arith.addf %52, %55 : vector<8x32xf32>
      %c0_43 = arith.constant 0 : index
      %c0_44 = arith.constant 0 : index
      %57 = vector.load %arg13[%c0_43, %c0_44] : memref<8x32xf32, #tpu.memory_space<vmem>>, vector<8x32xf32>
      tpu.vector_store %arg13[%c0_43, %c0_44], %56 {strides = array<i32>} : memref<8x32xf32, #tpu.memory_space<vmem>>, vector<8x32xf32>,
    } else {
    }
    %c3_i32 = arith.constant 3 : i32
    %41 = arith.cmpi eq, %arg2, %c3_i32 : i32
    %c1_i32_31 = arith.constant 1 : i32
    %42 = arith.cmpi eq, %arg3, %c1_i32_31 : i32
    %43 = arith.andi %41, %42 : i1
    %44 = arith.extui %43 : i1 to i32
    %c0_i32_32 = arith.constant 0 : i32
    %45 = arith.cmpi ne, %44, %c0_i32_32 : i32
    scf.if %45 {
      %c0_33 = arith.constant 0 : index
      %c0_34 = arith.constant 0 : index
      %46 = vector.load %arg13[%c0_33, %c0_34] : memref<8x32xf32, #tpu.memory_space<vmem>>, vector<8x32xf32>
      %c0_35 = arith.constant 0 : index
      %c0_36 = arith.constant 0 : index
      %47 = vector.load %arg8[%c0_35, %c0_36] : memref<1x32xf32, #tpu.memory_space<vmem>>, vector<1x32xf32>
      %48 = vector.broadcast %47 : vector<1x32xf32> to vector<8x32xf32>
      %49 = arith.addf %46, %48 : vector<8x32xf32>
      %c0_37 = arith.constant 0 : index
      %c0_38 = arith.constant 0 : index
      %c0_39 = arith.constant 0 : index
      %50 = vector.load %arg9[%c0_37, %c0_38, %c0_39] : memref<1x8x32xf32, #tpu.memory_space<vmem>>, vector<1x8x32xf32>
      %51 = vector.shape_cast %50 : vector<1x8x32xf32> to vector<8x32xf32>
      %52 = vector.shape_cast %49 : vector<8x32xf32> to vector<1x8x32xf32>
      tpu.vector_store %arg9[%c0_37, %c0_38, %c0_39], %52 {strides = array<i32>} : memref<1x8x32xf32, #tpu.memory_space<vmem>>, vector<1x8x32xf32>,
    } else {
    }
    return
  }
  func.func @transform_0(%arg0: i32, %arg1: i32, %arg2: i32, %arg3: i32) -> (i32, i32, i32, i32) {
    %c0_i32 = arith.constant 0 : i32
    %c0_i32_0 = arith.constant 0 : i32
    return %arg0, %arg2, %arg1, %c0_i32 : i32, i32, i32, i32
  }
  func.func @transform_1(%arg0: i32, %arg1: i32, %arg2: i32, %arg3: i32) -> (i32, i32, i32, i32) {
    %c0_i32 = arith.constant 0 : i32
    %c0_i32_0 = arith.constant 0 : i32
    return %arg0, %arg2, %arg3, %c0_i32 : i32, i32, i32, i32
  }
  func.func @transform_2(%arg0: i32, %arg1: i32, %arg2: i32, %arg3: i32) -> (i32, i32, i32, i32) {
    %c0_i32 = arith.constant 0 : i32
    %c0_i32_0 = arith.constant 0 : i32
    return %arg0, %arg2, %arg3, %c0_i32 : i32, i32, i32, i32
  }
  func.func @transform_3(%arg0: i32, %arg1: i32, %arg2: i32, %arg3: i32) -> (i32, i32, i32) {
    %c0_i32 = arith.constant 0 : i32
    %c0_i32_0 = arith.constant 0 : i32
    %c0_i32_1 = arith.constant 0 : i32
    return %arg2, %c0_i32, %c0_i32_0 : i32, i32, i32
  }
  func.func @transform_4(%arg0: i32, %arg1: i32, %arg2: i32, %arg3: i32) -> (i32, i32) {
    %c0_i32 = arith.constant 0 : i32
    %c0_i32_0 = arith.constant 0 : i32
    %c0_i32_1 = arith.constant 0 : i32
    return %c0_i32, %c0_i32_0 : i32, i32
  }
  func.func @transform_5(%arg0: i32, %arg1: i32, %arg2: i32, %arg3: i32) -> (i32, i32, i32) {
    %c0_i32 = arith.constant 0 : i32
    %c0_i32_0 = arith.constant 0 : i32
    return %arg0, %arg1, %c0_i32 : i32, i32, i32
  }
}

module attributes {stable_mosaic.version = 11 : i64} {
  func.func @_ffn_kernel(%arg0: i32, %arg1: memref<16x32xf32, #tpu.memory_space<vmem>>, %arg2: memref<32x64xbf16, #tpu.memory_space<vmem>>, %arg3: memref<1x64xf32, #tpu.memory_space<vmem>>, %arg4: memref<64x32xbf16, #tpu.memory_space<vmem>>, %arg5: memref<1x32xf32, #tpu.memory_space<vmem>>, %arg6: memref<1x32xf32, #tpu.memory_space<vmem>>, %arg7: memref<1x32xf32, #tpu.memory_space<vmem>>, %arg8: memref<16x32xf32, #tpu.memory_space<vmem>>) attributes {dimension_semantics = [#tpu.dimension_semantics<parallel>], iteration_bounds = array<i64: 2>, scalar_prefetch = 0 : i64, scratch_operands = 0 : i64, tpu.core_type = #tpu.core_type<tc>, window_params = [{transform_indices = @transform_0, window_bounds = array<i64: 16, 32>}, {pipeline_mode = #tpu.pipeline_mode<synchronous>, transform_indices = @transform_1, window_bounds = array<i64: 32, 64>}, {pipeline_mode = #tpu.pipeline_mode<synchronous>, transform_indices = @transform_2, window_bounds = array<i64: 1, 64>}, {pipeline_mode = #tpu.pipeline_mode<synchronous>, transform_indices = @transform_3, window_bounds = array<i64: 64, 32>}, {pipeline_mode = #tpu.pipeline_mode<synchronous>, transform_indices = @transform_4, window_bounds = array<i64: 1, 32>}, {pipeline_mode = #tpu.pipeline_mode<synchronous>, transform_indices = @transform_5, window_bounds = array<i64: 1, 32>}, {pipeline_mode = #tpu.pipeline_mode<synchronous>, transform_indices = @transform_6, window_bounds = array<i64: 1, 32>}, {transform_indices = @transform_7, window_bounds = array<i64: 16, 32>}]} {
    %c0 = arith.constant 0 : index
    %c0_0 = arith.constant 0 : index
    %0 = vector.load %arg1[%c0, %c0_0] : memref<16x32xf32, #tpu.memory_space<vmem>>, vector<16x32xf32>
    %1 = arith.truncf %0 : vector<16x32xf32> to vector<16x32xbf16>
    %c0_1 = arith.constant 0 : index
    %c0_2 = arith.constant 0 : index
    %2 = vector.load %arg2[%c0_1, %c0_2] : memref<32x64xbf16, #tpu.memory_space<vmem>>, vector<32x64xbf16>
    %cst = arith.constant dense<0.000000e+00> : vector<16x64xf32>
    %3 = tpu.matmul %1, %2, %cst {dimension_numbers = #tpu.dot_dimension_numbers<[1], [0], [0], [1], [0, 0, 1, 1], [], []>} : vector<16x32xbf16>, vector<32x64xbf16>, vector<16x64xf32> -> vector<16x64xf32>
    %c0_3 = arith.constant 0 : index
    %c0_4 = arith.constant 0 : index
    %4 = vector.load %arg3[%c0_3, %c0_4] : memref<1x64xf32, #tpu.memory_space<vmem>>, vector<1x64xf32>
    %5 = vector.broadcast %4 : vector<1x64xf32> to vector<16x64xf32>
    %6 = arith.addf %3, %5 : vector<16x64xf32>
    %cst_5 = arith.constant 0.000000e+00 : f32
    %7 = vector.broadcast %cst_5 : f32 to vector<16x64xf32>
    %8 = arith.maximumf %6, %7 : vector<16x64xf32>
    %9 = arith.truncf %8 : vector<16x64xf32> to vector<16x64xbf16>
    %c0_6 = arith.constant 0 : index
    %c0_7 = arith.constant 0 : index
    %10 = vector.load %arg4[%c0_6, %c0_7] : memref<64x32xbf16, #tpu.memory_space<vmem>>, vector<64x32xbf16>
    %cst_8 = arith.constant dense<0.000000e+00> : vector<16x32xf32>
    %11 = tpu.matmul %9, %10, %cst_8 {dimension_numbers = #tpu.dot_dimension_numbers<[1], [0], [0], [1], [0, 0, 1, 1], [], []>} : vector<16x64xbf16>, vector<64x32xbf16>, vector<16x32xf32> -> vector<16x32xf32>
    %c0_9 = arith.constant 0 : index
    %c0_10 = arith.constant 0 : index
    %12 = vector.load %arg5[%c0_9, %c0_10] : memref<1x32xf32, #tpu.memory_space<vmem>>, vector<1x32xf32>
    %13 = vector.broadcast %12 : vector<1x32xf32> to vector<16x32xf32>
    %14 = arith.addf %11, %13 : vector<16x32xf32>
    %15 = arith.addf %14, %0 : vector<16x32xf32>
    %cst_11 = arith.constant dense<0.000000e+00> : vector<16xf32>
    %16 = vector.multi_reduction <add>, %15, %cst_11 [1] : vector<16x32xf32> to vector<16xf32>
    %17 = vector.shape_cast %16 : vector<16xf32> to vector<16x1xf32>
    %cst_12 = arith.constant 3.200000e+01 : f32
    %18 = vector.broadcast %cst_12 : f32 to vector<16x1xf32>
    %19 = arith.divf %17, %18 : vector<16x1xf32>
    %20 = vector.broadcast %19 : vector<16x1xf32> to vector<16x32xf32>
    %21 = arith.subf %15, %20 : vector<16x32xf32>
    %22 = arith.mulf %21, %21 : vector<16x32xf32>
    %cst_13 = arith.constant dense<0.000000e+00> : vector<16xf32>
    %23 = vector.multi_reduction <add>, %22, %cst_13 [1] : vector<16x32xf32> to vector<16xf32>
    %24 = vector.shape_cast %23 : vector<16xf32> to vector<16x1xf32>
    %cst_14 = arith.constant 3.200000e+01 : f32
    %25 = vector.broadcast %cst_14 : f32 to vector<16x1xf32>
    %26 = arith.divf %24, %25 : vector<16x1xf32>
    %27 = vector.broadcast %19 : vector<16x1xf32> to vector<16x32xf32>
    %28 = arith.subf %15, %27 : vector<16x32xf32>
    %cst_15 = arith.constant 9.99999974E-6 : f32
    %29 = vector.broadcast %cst_15 : f32 to vector<16x1xf32>
    %30 = arith.addf %26, %29 : vector<16x1xf32>
    %31 = math.rsqrt %30 : vector<16x1xf32>
    %32 = vector.broadcast %31 : vector<16x1xf32> to vector<16x32xf32>
    %33 = arith.mulf %28, %32 : vector<16x32xf32>
    %c0_16 = arith.constant 0 : index
    %c0_17 = arith.constant 0 : index
    %34 = vector.load %arg6[%c0_16, %c0_17] : memref<1x32xf32, #tpu.memory_space<vmem>>, vector<1x32xf32>
    %35 = vector.broadcast %34 : vector<1x32xf32> to vector<16x32xf32>
    %36 = arith.mulf %33, %35 : vector<16x32xf32>
    %c0_18 = arith.constant 0 : index
    %c0_19 = arith.constant 0 : index
    %37 = vector.load %arg7[%c0_18, %c0_19] : memref<1x32xf32, #tpu.memory_space<vmem>>, vector<1x32xf32>
    %38 = vector.broadcast %37 : vector<1x32xf32> to vector<16x32xf32>
    %39 = arith.addf %36, %38 : vector<16x32xf32>
    %c0_20 = arith.constant 0 : index
    %c0_21 = arith.constant 0 : index
    %40 = vector.load %arg8[%c0_20, %c0_21] : memref<16x32xf32, #tpu.memory_space<vmem>>, vector<16x32xf32>
    tpu.vector_store %arg8[%c0_20, %c0_21], %39 {strides = array<i32>} : memref<16x32xf32, #tpu.memory_space<vmem>>, vector<16x32xf32>,
    return
  }
  func.func @transform_0(%arg0: i32) -> (i32, i32) {
    %c0_i32 = arith.constant 0 : i32
    %c0_i32_0 = arith.constant 0 : i32
    return %arg0, %c0_i32 : i32, i32
  }
  func.func @transform_1(%arg0: i32) -> (i32, i32) {
    %c0_i32 = arith.constant 0 : i32
    %c0_i32_0 = arith.constant 0 : i32
    %c0_i32_1 = arith.constant 0 : i32
    return %c0_i32, %c0_i32_0 : i32, i32
  }
  func.func @transform_2(%arg0: i32) -> (i32, i32) {
    %c0_i32 = arith.constant 0 : i32
    %c0_i32_0 = arith.constant 0 : i32
    %c0_i32_1 = arith.constant 0 : i32
    return %c0_i32, %c0_i32_0 : i32, i32
  }
  func.func @transform_3(%arg0: i32) -> (i32, i32) {
    %c0_i32 = arith.constant 0 : i32
    %c0_i32_0 = arith.constant 0 : i32
    %c0_i32_1 = arith.constant 0 : i32
    return %c0_i32, %c0_i32_0 : i32, i32
  }
  func.func @transform_4(%arg0: i32) -> (i32, i32) {
    %c0_i32 = arith.constant 0 : i32
    %c0_i32_0 = arith.constant 0 : i32
    %c0_i32_1 = arith.constant 0 : i32
    return %c0_i32, %c0_i32_0 : i32, i32
  }
  func.func @transform_5(%arg0: i32) -> (i32, i32) {
    %c0_i32 = arith.constant 0 : i32
    %c0_i32_0 = arith.constant 0 : i32
    %c0_i32_1 = arith.constant 0 : i32
    return %c0_i32, %c0_i32_0 : i32, i32
  }
  func.func @transform_6(%arg0: i32) -> (i32, i32) {
    %c0_i32 = arith.constant 0 : i32
    %c0_i32_0 = arith.constant 0 : i32
    %c0_i32_1 = arith.constant 0 : i32
    return %c0_i32, %c0_i32_0 : i32, i32
  }
  func.func @transform_7(%arg0: i32) -> (i32, i32) {
    %c0_i32 = arith.constant 0 : i32
    %c0_i32_0 = arith.constant 0 : i32
    return %arg0, %c0_i32 : i32, i32
  }
}

</mosaic_0001>

<llo_original>
// kernel: transformer_encoder_layer.3
$region0: #{transformer_encoder_layer.3}
  #allocation0 [shape = 'u32[]', space=smem, size = 0x4, offset = 0x4, fixed_abs, tag = 'smem constant byte address 0x4 - core index']
  #allocation1 [shape = 'u32[144,128]{1,0:T(1,128)}', space=vmem, size = 0x12000, scoped, tag = 'internal scratch']
  %s0 = inlined_call_operand.vmem [shape: f32[2,16,32], index: 0, kind: input, shape index: {}]
  %s1 = inlined_call_operand.vmem [shape: bf16[32,96], index: 1, kind: input, shape index: {}]
  %s2 = inlined_call_operand.vmem [shape: f32[1,96], index: 2, kind: input, shape index: {}]
  %s3 = inlined_call_operand.vmem [shape: bf16[2,4,16,8], index: 3, kind: output, shape index: {0}]
  %s4 = inlined_call_operand.vmem [shape: bf16[2,4,16,8], index: 4, kind: output, shape index: {1}]
  %s5 = inlined_call_operand.vmem [shape: bf16[2,4,16,8], index: 5, kind: output, shape index: {2}]
  %6 = xla_tuple %s3, %s4, %s5
  %s7 = sld [smem:[#allocation0]]
  $region172: #{transformer_encoder_layer.3} parent=0
    _
  %s9 = ssub.s32 1, %s7
  %s10 = scalar_select 0, %s9, %s7
  $region1: #{transformer_encoder_layer.3} parent=0
    #allocation2 [shape = 'u8[16384]{0}', space=vmem, size = 0x4000, scoped, tag = 'output window, operand 0']
    #allocation3 [shape = 'u8[16384]{0}', space=vmem, size = 0x4000, scoped, tag = 'output window, operand 1']
    #allocation4 [shape = 'u8[16384]{0}', space=vmem, size = 0x4000, scoped, tag = 'output window, operand 2']
    loop: start=0, step=1, limit=6
    $region2: #{transformer_encoder_layer.3} parent=1 // loop_pre_header
      _
    $region3: #{transformer_encoder_layer.3} parent=1 // loop_header
      %s12 = sphi 0, %s16
      %p13 = scmp.ge.s32.totalorder %s12, 6
      %s19 = sphi 0, %s31
      %s20 = sphi 0, %s27
      %s21 = sphi 0, %s19
      %s22 = sphi 0, %s20
      %s23 = sphi 0, %s21
      %s24 = sphi 0, %s22
      %s36 = sphi 0, %s38
      %s39 = sphi 0, %s36
      %s40 = sphi 0, %s39
      %s56 = sphi 0, %s40
      %s60 = sphi 0, %s60
      %s62 = sphi 0, %s60
      %s63 = sphi 0, %s62
      %s77 = sphi 0, %s63
      %s81 = sphi 0, %s81
      %s83 = sphi 0, %s81
      %s84 = sphi 0, %s83
      %s98 = sphi 0, %s84
      %s106 = sphi 0, %s108
      %s109 = sphi 0, %s106
      %s110 = sphi 0, %s109
      %s126 = sphi 0, %s110
      %s134 = sphi 0, %s136
      %s137 = sphi 0, %s134
      %s138 = sphi 0, %s137
      %s154 = sphi 0, %s138
      %s162 = sphi 0, %s164
      %s165 = sphi 0, %s162
      %s166 = sphi 0, %s165
      %s182 = sphi 0, %s166
    $region4: #{transformer_encoder_layer.3} parent=1 // loop_header_branch
      %15 = sbr.rel (%p13) target = $region8
    $region5: #{transformer_encoder_layer.3} parent=1 // loop_body
      %s17 = ssub.s32 %s12, 1
      %s18 = ssub.s32 %s12, 2
      %s25 = sadd.s32 1, %s20
      %p26 = scmp.ge.s32.totalorder %s25, 2
      %s27 = scalar_select %p26, 0, %s25
      %s28 = sadd.s32 1, %s19
      %s29 = scalar_select %p26, %s28, %s19
      %p30 = scmp.ge.s32.totalorder %s29, 2
      %s31 = scalar_select %p30, 0, %s29
      %s32 = ssub.s32 %s19, %s31
      %s33 = ssub.s32 %s20, %s27
      %s34 = sor.u32 %s32, %s33
      %p35 = scmp.eq.s32.totalorder %s34, 0
      %s37 = sadd.s32 %s36, 1
      %s38 = scalar_select %p35, %s36, %s37
      %p41 = pneg %p35
      %p42 = scmp.eq.s32.totalorder %s12, 3
      %p43 = por %p41, %p42
      %p44 = scmp.ne.s32.totalorder %s36, %s39
      %p45 = scmp.eq.s32.totalorder %s12, 0
      %p46 = por %p44, %p45
      %p47 = scmp.ne.s32.totalorder %s36, %s39
      %p48 = scmp.eq.s32.totalorder %s17, 3
      %p49 = por %p47, %p48
      %p50 = scmp.ne.s32.totalorder %s39, %s40
      %p51 = scmp.eq.s32.totalorder %s17, 0
      %p52 = por %p50, %p51
      %p53 = scmp.ne.s32.totalorder %s39, %s40
      %p54 = scmp.eq.s32.totalorder %s18, 3
      %p55 = por %p53, %p54
      %p57 = scmp.ne.s32.totalorder %s40, %s56
      %p58 = scmp.eq.s32.totalorder %s18, 0
      %p59 = por %p57, %p58
      %s61 = sadd.s32 %s60, 1
      %p64 = scmp.eq.s32.totalorder %s12, 3
      %p65 = scmp.ne.s32.totalorder %s60, %s62
      %p66 = scmp.eq.s32.totalorder %s12, 0
      %p67 = por %p65, %p66
      %p68 = scmp.ne.s32.totalorder %s60, %s62
      %p69 = scmp.eq.s32.totalorder %s17, 3
      %p70 = por %p68, %p69
      %p71 = scmp.ne.s32.totalorder %s62, %s63
      %p72 = scmp.eq.s32.totalorder %s17, 0
      %p73 = por %p71, %p72
      %p74 = scmp.ne.s32.totalorder %s62, %s63
      %p75 = scmp.eq.s32.totalorder %s18, 3
      %p76 = por %p74, %p75
      %p78 = scmp.ne.s32.totalorder %s63, %s77
      %p79 = scmp.eq.s32.totalorder %s18, 0
      %p80 = por %p78, %p79
      %s82 = sadd.s32 %s81, 1
      %p85 = scmp.eq.s32.totalorder %s12, 3
      %p86 = scmp.ne.s32.totalorder %s81, %s83
      %p87 = scmp.eq.s32.totalorder %s12, 0
      %p88 = por %p86, %p87
      %p89 = scmp.ne.s32.totalorder %s81, %s83
      %p90 = scmp.eq.s32.totalorder %s17, 3
      %p91 = por %p89, %p90
      %p92 = scmp.ne.s32.totalorder %s83, %s84
      %p93 = scmp.eq.s32.totalorder %s17, 0
      %p94 = por %p92, %p93
      %p95 = scmp.ne.s32.totalorder %s83, %s84
      %p96 = scmp.eq.s32.totalorder %s18, 3
      %p97 = por %p95, %p96
      %p99 = scmp.ne.s32.totalorder %s84, %s98
      %p100 = scmp.eq.s32.totalorder %s18, 0
      %p101 = por %p99, %p100
      %s102 = ssub.s32 %s19, %s31
      %s103 = ssub.s32 %s20, %s27
      %s104 = sor.u32 %s102, %s103
      %p105 = scmp.eq.s32.totalorder %s104, 0
      %s107 = sadd.s32 %s106, 1
      %s108 = scalar_select %p105, %s106, %s107
      %p111 = pneg %p105
      %p112 = scmp.eq.s32.totalorder %s12, 3
      %p113 = por %p111, %p112
      %p114 = scmp.ne.s32.totalorder %s106, %s109
      %p115 = scmp.eq.s32.totalorder %s12, 0
      %p116 = por %p114, %p115
      %p117 = scmp.ne.s32.totalorder %s106, %s109
      %p118 = scmp.eq.s32.totalorder %s17, 3
      %p119 = por %p117, %p118
      %p120 = scmp.ne.s32.totalorder %s109, %s110
      %p121 = scmp.eq.s32.totalorder %s17, 0
      %p122 = por %p120, %p121
      %p123 = scmp.ne.s32.totalorder %s109, %s110
      %p124 = scmp.eq.s32.totalorder %s18, 3
      %p125 = por %p123, %p124
      %p127 = scmp.ne.s32.totalorder %s110, %s126
      %p128 = scmp.eq.s32.totalorder %s18, 0
      %p129 = por %p127, %p128
      %s130 = ssub.s32 %s19, %s31
      %s131 = ssub.s32 %s20, %s27
      %s132 = sor.u32 %s130, %s131
      %p133 = scmp.eq.s32.totalorder %s132, 0
      %s135 = sadd.s32 %s134, 1
      %s136 = scalar_select %p133, %s134, %s135
      %p139 = pneg %p133
      %p140 = scmp.eq.s32.totalorder %s12, 3
      %p141 = por %p139, %p140
      %p142 = scmp.ne.s32.totalorder %s134, %s137
      %p143 = scmp.eq.s32.totalorder %s12, 0
      %p144 = por %p142, %p143
      %p145 = scmp.ne.s32.totalorder %s134, %s137
      %p146 = scmp.eq.s32.totalorder %s17, 3
      %p147 = por %p145, %p146
      %p148 = scmp.ne.s32.totalorder %s137, %s138
      %p149 = scmp.eq.s32.totalorder %s17, 0
      %p150 = por %p148, %p149
      %p151 = scmp.ne.s32.totalorder %s137, %s138
      %p152 = scmp.eq.s32.totalorder %s18, 3
      %p153 = por %p151, %p152
      %p155 = scmp.ne.s32.totalorder %s138, %s154
      %p156 = scmp.eq.s32.totalorder %s18, 0
      %p157 = por %p155, %p156
      %s158 = ssub.s32 %s19, %s31
      %s159 = ssub.s32 %s20, %s27
      %s160 = sor.u32 %s158, %s159
      %p161 = scmp.eq.s32.totalorder %s160, 0
      %s163 = sadd.s32 %s162, 1
      %s164 = scalar_select %p161, %s162, %s163
      %p167 = pneg %p161
      %p168 = scmp.eq.s32.totalorder %s12, 3
      %p169 = por %p167, %p168
      %p170 = scmp.ne.s32.totalorder %s162, %s165
      %p171 = scmp.eq.s32.totalorder %s12, 0
      %p172 = por %p170, %p171
      %p173 = scmp.ne.s32.totalorder %s162, %s165
      %p174 = scmp.eq.s32.totalorder %s17, 3
      %p175 = por %p173, %p174
      %p176 = scmp.ne.s32.totalorder %s165, %s166
      %p177 = scmp.eq.s32.totalorder %s17, 0
      %p178 = por %p176, %p177
      %p179 = scmp.ne.s32.totalorder %s165, %s166
      %p180 = scmp.eq.s32.totalorder %s18, 3
      %p181 = por %p179, %p180
      %p183 = scmp.ne.s32.totalorder %s166, %s182
      %p184 = scmp.eq.s32.totalorder %s18, 0
      %p185 = por %p183, %p184
      %p186 = scmp.le.s32.totalorder 1, %s12
      %p187 = scmp.lt.s32.totalorder %s12, 5
      %p188 = pnand %p186, %p187
      %p189 = pneg %p188
      // Predicated region
      $region9: #{transformer_encoder_layer.3} parent=5 // pred_check
        _
      $region10: #{transformer_encoder_layer.3} parent=5 // pred_check_branch
        %191 = sbr.rel (%p188) target = $region12
      $region11: #{transformer_encoder_layer.3} parent=5 // pred_region
        %s192 = ssub.s32 %s12, 1
        // Predicated region
        $region13: #{transformer_encoder_layer.3} parent=11 // pred_check
          %p193 = pneg %p73
        $region14: #{transformer_encoder_layer.3} parent=11 // pred_check_branch
          %195 = sbr.rel (%p193) target = $region16
        $region15: #{transformer_encoder_layer.3} parent=11 // pred_region
          _
        $region16: #{transformer_encoder_layer.3} parent=11 // pred_fallthru
          _
        // Predicated region
        $region17: #{transformer_encoder_layer.3} parent=11 // pred_check
          %p196 = pneg %p94
        $region18: #{transformer_encoder_layer.3} parent=11 // pred_check_branch
          %198 = sbr.rel (%p196) target = $region20
        $region19: #{transformer_encoder_layer.3} parent=11 // pred_region
          _
        $region20: #{transformer_encoder_layer.3} parent=11 // pred_fallthru
          _
      $region12: #{transformer_encoder_layer.3} parent=5 // pred_fallthru
        _
      %p199 = scmp.lt.s32.totalorder %s12, 4
      // Predicated region
      $region21: #{transformer_encoder_layer.3} parent=5 // pred_check
        %p200 = pneg %p199
      $region22: #{transformer_encoder_layer.3} parent=5 // pred_check_branch
        %202 = sbr.rel (%p200) target = $region24
      $region23: #{transformer_encoder_layer.3} parent=5 // pred_region
        // Predicated region
        $region25: #{transformer_encoder_layer.3} parent=23 // pred_check
          %p203 = pneg %p46
        $region26: #{transformer_encoder_layer.3} parent=23 // pred_check_branch
          %205 = sbr.rel (%p203) target = $region28
        $region27: #{transformer_encoder_layer.3} parent=23 // pred_region
          %p206 = scmp.lt.s32.totalorder %s19, 1
          %s207 = scalar_select %p206, %s19, 1
          %p208 = scmp.lt.s32.totalorder %s20, 1
          %s209 = scalar_select %p208, %s20, 1
          %s210 = smul.addr %s207, 2
          %s211 = sadd.s32 %s209, %s210
          %s212 = smul.addr %s211, 8
          %s213 = scalar_lea.vmem %s0, %s212
        $region28: #{transformer_encoder_layer.3} parent=23 // pred_fallthru
          _
      $region24: #{transformer_encoder_layer.3} parent=5 // pred_fallthru
        _
      %p214 = scmp.le.s32.totalorder 1, %s12
      %p215 = scmp.lt.s32.totalorder %s12, 5
      %p216 = pnand %p214, %p215
      %p217 = pneg %p216
      // Predicated region
      $region29: #{transformer_encoder_layer.3} parent=5 // pred_check
        _
      $region30: #{transformer_encoder_layer.3} parent=5 // pred_check_branch
        %219 = sbr.rel (%p216) target = $region32
      $region31: #{transformer_encoder_layer.3} parent=5 // pred_region
        %s220 = ssub.s32 %s12, 1
        %p221 = scmp.lt.s32.totalorder %s21, 1
        %s222 = scalar_select %p221, %s21, 1
        %p223 = scmp.lt.s32.totalorder %s22, 1
        %s224 = scalar_select %p223, %s22, 1
        %s225 = smul.addr %s222, 2
        %s226 = sadd.s32 %s224, %s225
        %s227 = smul.addr %s226, 8
        %s228 = scalar_lea.vmem %s0, %s227
        %p229 = pneg %p52
        %p230 = pneg %p49
        %p231 = pneg %p73
        %p232 = pneg %p70
        %p233 = pneg %p94
        %p234 = pneg %p91
        %p235 = pneg %p122
        %p236 = pneg %p119
        %s237 = sand.u32 %s109, 1
        %s238 = sand.u32 %s109, 1
        %s239 = smul.addr %s238, 16
        %s240 = scalar_lea.vmem [#allocation2], %s239
        %p241 = pneg %p150
        %p242 = pneg %p147
        %s243 = sand.u32 %s137, 1
        %s244 = sand.u32 %s137, 1
        %s245 = smul.addr %s244, 16
        %s246 = scalar_lea.vmem [#allocation3], %s245
        %p247 = pneg %p178
        %p248 = pneg %p175
        %s249 = sand.u32 %s165, 1
        %s250 = sand.u32 %s165, 1
        %s251 = smul.addr %s250, 16
        %s252 = scalar_lea.vmem [#allocation4], %s251
        %p253 = scmp.lt.s32.totalorder %s21, 1
        %s254 = scalar_select %p253, %s21, 1
        %p255 = scmp.lt.s32.totalorder %s22, 1
        %s256 = scalar_select %p255, %s22, 1
        %s257 = smul.addr %s254, 2
        %s258 = sadd.s32 %s256, %s257
        %s259 = smul.addr %s258, 8
        %s260 = scalar_lea.vmem %s0, %s259
        %v262 = vld [vmem:[%s260] sm:$0xff]
        %v263 = vpack.c.bf16 %v262, %v262
        %v264 = vld [vmem:[%s1] sm:$0xf]
        %v265 = vld [vmem:[%s1 + $0x4] sm:$0xf]
        %v266 = vld [vmem:[%s1 + $0x8] sm:$0xf]
        %v267 = vld [vmem:[%s1 + $0xc] sm:$0xf]
        %v268 = vld [vmem:[%s2] sm:$0x1]
        %v270 = vlaneseq
        %v271 = vshrl.u32 %v270, 7
        %v272 = vsub.s32 0, %v271
        %v273 = vrot.slane %v268, %v272
        %v279 = vunpack.c.l.b16 %v264
        %v280 = vunpack.c.l.b16 %v265
        %v281 = vunpack.c.l.b16 %v266
        %v282 = vunpack.c.l.b16 %v267
        %v283 = vpack.c.b16 %v280, %v279
        %v284 = vpack.c.b16 %v282, %v281
        %vm287 = vcmask 261120
        %v289 = vsel %vm287, %v263, 0
        %291 = vmatprep.subr.bf16.mxu0 0
        %292 = vmatpush1.bf16.msra.mxu0 0
        %293 = vmatprep.subr.bf16.mxu0 0
        %294 = vmatpush1.bf16.msra.mxu0 0
        %295 = vmatprep.subr.bf16.mxu0 0
        %296 = vmatpush1.bf16.msra.mxu0 0
        %297 = vmatprep.subr.bf16.mxu0 0
        %298 = vmatpush1.bf16.msra.mxu0 0
        %299 = vmatprep.subr.bf16.mxu0 0
        %300 = vmatpush1.bf16.msra.mxu0 0
        %301 = vmatprep.subr.bf16.mxu0 0
        %302 = vmatpush1.bf16.msra.mxu0 0
        %303 = vmatprep.subr.bf16.mxu0 0
        %304 = vmatpush1.bf16.msra.mxu0 %v284
        %305 = vmatprep.subr.bf16.mxu0 0
        %306 = vmatpush1.bf16.msra.mxu0 %v283
        %307 = vmatprep.subr.bf16.mxu0 0
        %308 = vmatpush2.bf16.msra.mxu0 0
        %309 = vmatprep.subr.bf16.mxu0 0
        %310 = vmatpush2.bf16.msra.mxu0 0
        %311 = vmatprep.subr.bf16.mxu0 0
        %312 = vmatpush2.bf16.msra.mxu0 0
        %313 = vmatprep.subr.bf16.mxu0 0
        %314 = vmatpush2.bf16.msra.mxu0 0
        %315 = vmatprep.subr.bf16.mxu0 0
        %316 = vmatpush2.bf16.msra.mxu0 0
        %317 = vmatprep.subr.bf16.mxu0 0
        %318 = vmatpush2.bf16.msra.mxu0 0
        %319 = vmatprep.subr.bf16.mxu0 0
        %320 = vmatpush2.bf16.msra.mxu0 0
        %321 = vmatprep.subr.bf16.mxu0 0
        %322 = vmatpush2.bf16.msra.mxu0 0
        %323 = vmatprep.mubr.bf16.mxu0 0
        %324 = vmatmul.mubr.bf16.gmra.mxu0 %v289
        %v325 = vpop.f32.mrf.mxu0
        %v326 = vadd.f32 %v273, %v325
        %v327 = vpop.f32.mrf.mxu0
        %v328 = vpop.f32.mrf.mxu0
        %v329 = vpop.f32.mrf.mxu0
        %330 = vdwg.mxu0
        %v331 = vmul.f32 %v326, 0.35355338
        %v332 = vpack.c.bf16 %v331, %v331
        %vm333 = vcmask 60416
        %334 = vst.msk [vmem:[%s240] sm:$0xf] %vm333, %v332
        %v335 = vpack.c.bf16 %v326, %v326
        %v337 = vunpack.c.l.b16 %v335
        %v338 = vpack.c.b16 %v337, %v337
        %339 = vrot.lane.b32.xlu0 %v338, 96
        %v340 = vpop.permute.xlu0 %339
        %342 = vst.msk [vmem:[%s246] sm:$0xf] %vm333, %v340
        %343 = vrot.lane.b32.xlu0 %v338, 64
        %v344 = vpop.permute.xlu0 %343
        %346 = vst.msk [vmem:[%s252] sm:$0xf] %vm333, %v344
        %v348 = vunpack.c.l.b16 %v332
        %v349 = vpack.c.b16 %v348, %v348
        %350 = vrot.lane.b32.xlu0 %v349, 120
        %v351 = vpop.permute.xlu0 %350
        %s353 = scalar_lea.vmem %s240, 4 [#allocation2]
        %354 = vst.msk [vmem:[%s353] sm:$0xf] %vm333, %v351
        %355 = vrot.lane.b32.xlu0 %v338, 88
        %v356 = vpop.permute.xlu0 %355
        %s358 = scalar_lea.vmem %s246, 4 [#allocation3]
        %359 = vst.msk [vmem:[%s358] sm:$0xf] %vm333, %v356
        %360 = vrot.lane.b32.xlu0 %v338, 56
        %v361 = vpop.permute.xlu0 %360
        %s363 = scalar_lea.vmem %s252, 4 [#allocation4]
        %364 = vst.msk [vmem:[%s363] sm:$0xf] %vm333, %v361
        %365 = vrot.lane.b32.xlu0 %v349, 112
        %v366 = vpop.permute.xlu0 %365
        %s368 = scalar_lea.vmem %s240, 8 [#allocation2]
        %369 = vst.msk [vmem:[%s368] sm:$0xf] %vm333, %v366
        %370 = vrot.lane.b32.xlu0 %v338, 80
        %v371 = vpop.permute.xlu0 %370
        %s373 = scalar_lea.vmem %s246, 8 [#allocation3]
        %374 = vst.msk [vmem:[%s373] sm:$0xf] %vm333, %v371
        %375 = vrot.lane.b32.xlu0 %v338, 48
        %v376 = vpop.permute.xlu0 %375
        %s378 = scalar_lea.vmem %s252, 8 [#allocation4]
        %379 = vst.msk [vmem:[%s378] sm:$0xf] %vm333, %v376
        %380 = vrot.lane.b32.xlu0 %v349, 104
        %v381 = vpop.permute.xlu0 %380
        %s383 = scalar_lea.vmem %s240, 12 [#allocation2]
        %384 = vst.msk [vmem:[%s383] sm:$0xf] %vm333, %v381
        %385 = vrot.lane.b32.xlu0 %v338, 72
        %v386 = vpop.permute.xlu0 %385
        %s388 = scalar_lea.vmem %s246, 12 [#allocation3]
        %389 = vst.msk [vmem:[%s388] sm:$0xf] %vm333, %v386
        %390 = vrot.lane.b32.xlu0 %v338, 40
        %v391 = vpop.permute.xlu0 %390
        %s393 = scalar_lea.vmem %s252, 12 [#allocation4]
        %394 = vst.msk [vmem:[%s393] sm:$0xf] %vm333, %v391
        %s395 = sand.u32 %s109, 1
        %s396 = sand.u32 %s109, 1
        %s397 = smul.addr %s396, 16
        %s398 = scalar_lea.vmem [#allocation2], %s397
        %s399 = sand.u32 %s137, 1
        %s400 = sand.u32 %s137, 1
        %s401 = smul.addr %s400, 16
        %s402 = scalar_lea.vmem [#allocation3], %s401
        %s403 = sand.u32 %s165, 1
        %s404 = sand.u32 %s165, 1
        %s405 = smul.addr %s404, 16
        %s406 = scalar_lea.vmem [#allocation4], %s405
        // Predicated region
        $region33: #{transformer_encoder_layer.3} parent=31 // pred_check
          %p407 = pneg %p119
        $region34: #{transformer_encoder_layer.3} parent=31 // pred_check_branch
          %409 = sbr.rel (%p407) target = $region36
        $region35: #{transformer_encoder_layer.3} parent=31 // pred_region
          %s410 = smul.addr %s21, 8
          %s411 = sadd.s32 %s22, %s410
          %s412 = smul.addr %s411, 4
          %s413 = scalar_lea.vmem %s3, %s412
          // Predicated region
          $region37: #{transformer_encoder_layer.3} parent=35 // pred_check
            _
          $region38: #{transformer_encoder_layer.3} parent=35 // pred_check_branch
            %415 = sbr.rel (0) target = $region40
          $region39: #{transformer_encoder_layer.3} parent=35 // pred_region
            // Predicated region
            $region41: #{transformer_encoder_layer.3} parent=39 // pred_check
              _
            $region42: #{transformer_encoder_layer.3} parent=39 // pred_check_branch
              %417 = sbr.rel target = $region44
            $region43: #{transformer_encoder_layer.3} parent=39 // pred_region
              // Predicated region
              $region56: #{transformer_encoder_layer.3} parent=43 // pred_check
                _
              $region57: #{transformer_encoder_layer.3} parent=43 // pred_check_branch
                %439 = sbr.rel (0) target = $region59
              $region58: #{transformer_encoder_layer.3} parent=43 // pred_region
                loop: start=0, step=1, limit=1
                $region60: #{transformer_encoder_layer.3} parent=58 // loop_pre_header
                  _
                $region61: #{transformer_encoder_layer.3} parent=58 // loop_header
                  %s441 = sphi 0, %s445
                  %p442 = scmp.ge.s32.totalorder %s441, 1
                  %s446 = sphi %s398, %s398
                  %s447 = sphi %s413, %s413
                $region62: #{transformer_encoder_layer.3} parent=58 // loop_header_branch
                  %444 = sbr.rel (%p442) target = $region66
                $region63: #{transformer_encoder_layer.3} parent=58 // loop_body
                  _
                $region64: #{transformer_encoder_layer.3} parent=58 // loop_footer
                  %s445 = sadd.s32 1, %s441
                $region65: #{transformer_encoder_layer.3} parent=58 // loop_footer_branch
                  %440 = sbr.rel target = $region61
                $region66: #{transformer_encoder_layer.3} parent=58 // loop_exit
                  _
                %s449 = ssub.s32 16, 1
                loop: start=0, step=1, limit=1
                $region67: #{transformer_encoder_layer.3} parent=58 // loop_pre_header
                  _
                $region68: #{transformer_encoder_layer.3} parent=58 // loop_header
                  %s451 = sphi 0, %s455
                  %p452 = scmp.ge.s32.totalorder %s451, 1
                  %s456 = sphi %s398, %s398
                  %s457 = sphi %s413, %s413
                $region69: #{transformer_encoder_layer.3} parent=58 // loop_header_branch
                  %454 = sbr.rel (%p452) target = $region73
                $region70: #{transformer_encoder_layer.3} parent=58 // loop_body
                  %v458 = vld [vmem:[%s456] sm:%s449]
                  %459 = vst [vmem:[%s457] sm:%s449] %v458
                  %v460 = vld [vmem:[%s456 + $0x4] sm:%s449]
                  %461 = vst [vmem:[%s457 + $0x8] sm:%s449] %v460
                  %v462 = vld [vmem:[%s456 + $0x8] sm:%s449]
                  %463 = vst [vmem:[%s457 + $0x10] sm:%s449] %v462
                  %v464 = vld [vmem:[%s456 + $0xc] sm:%s449]
                  %465 = vst [vmem:[%s457 + $0x18] sm:%s449] %v464
                $region71: #{transformer_encoder_layer.3} parent=58 // loop_footer
                  %s455 = sadd.s32 1, %s451
                $region72: #{transformer_encoder_layer.3} parent=58 // loop_footer_branch
                  %450 = sbr.rel target = $region68
                $region73: #{transformer_encoder_layer.3} parent=58 // loop_exit
                  _
              $region59: #{transformer_encoder_layer.3} parent=43 // pred_fallthru
                _
            $region44: #{transformer_encoder_layer.3} parent=39 // pred_fallthru
              _
            // Predicated region
            $region45: #{transformer_encoder_layer.3} parent=39 // pred_check
              _
            $region46: #{transformer_encoder_layer.3} parent=39 // pred_check_branch
              %419 = sbr.rel (0) target = $region48
            $region47: #{transformer_encoder_layer.3} parent=39 // pred_region
              %s421 = ssub.s32 16, 1
              loop: start=0, step=1, limit=1
              $region49: #{transformer_encoder_layer.3} parent=47 // loop_pre_header
                _
              $region50: #{transformer_encoder_layer.3} parent=47 // loop_header
                %s423 = sphi 0, %s427
                %p424 = scmp.ge.s32.totalorder %s423, 1
                %s428 = sphi %s398, %s398
                %s429 = sphi %s413, %s413
              $region51: #{transformer_encoder_layer.3} parent=47 // loop_header_branch
                %426 = sbr.rel (%p424) target = $region55
              $region52: #{transformer_encoder_layer.3} parent=47 // loop_body
                %v430 = vld [vmem:[%s428] sm:%s421]
                %431 = vst [vmem:[%s429] sm:%s421] %v430
                %v432 = vld [vmem:[%s428 + $0x4] sm:%s421]
                %433 = vst [vmem:[%s429 + $0x8] sm:%s421] %v432
                %v434 = vld [vmem:[%s428 + $0x8] sm:%s421]
                %435 = vst [vmem:[%s429 + $0x10] sm:%s421] %v434
                %v436 = vld [vmem:[%s428 + $0xc] sm:%s421]
                %437 = vst [vmem:[%s429 + $0x18] sm:%s421] %v436
              $region53: #{transformer_encoder_layer.3} parent=47 // loop_footer
                %s427 = sadd.s32 1, %s423
              $region54: #{transformer_encoder_layer.3} parent=47 // loop_footer_branch
                %422 = sbr.rel target = $region50
              $region55: #{transformer_encoder_layer.3} parent=47 // loop_exit
                _
            $region48: #{transformer_encoder_layer.3} parent=39 // pred_fallthru
              _
          $region40: #{transformer_encoder_layer.3} parent=35 // pred_fallthru
            _
          %466 = vnop
        $region36: #{transformer_encoder_layer.3} parent=31 // pred_fallthru
          _
        // Predicated region
        $region74: #{transformer_encoder_layer.3} parent=31 // pred_check
          %p467 = pneg %p147
        $region75: #{transformer_encoder_layer.3} parent=31 // pred_check_branch
          %469 = sbr.rel (%p467) target = $region77
        $region76: #{transformer_encoder_layer.3} parent=31 // pred_region
          %s470 = smul.addr %s21, 8
          %s471 = sadd.s32 %s22, %s470
          %s472 = smul.addr %s471, 4
          %s473 = scalar_lea.vmem %s4, %s472
          // Predicated region
          $region78: #{transformer_encoder_layer.3} parent=76 // pred_check
            _
          $region79: #{transformer_encoder_layer.3} parent=76 // pred_check_branch
            %475 = sbr.rel (0) target = $region81
          $region80: #{transformer_encoder_layer.3} parent=76 // pred_region
            // Predicated region
            $region82: #{transformer_encoder_layer.3} parent=80 // pred_check
              _
            $region83: #{transformer_encoder_layer.3} parent=80 // pred_check_branch
              %477 = sbr.rel target = $region85
            $region84: #{transformer_encoder_layer.3} parent=80 // pred_region
              // Predicated region
              $region97: #{transformer_encoder_layer.3} parent=84 // pred_check
                _
              $region98: #{transformer_encoder_layer.3} parent=84 // pred_check_branch
                %499 = sbr.rel (0) target = $region100
              $region99: #{transformer_encoder_layer.3} parent=84 // pred_region
                loop: start=0, step=1, limit=1
                $region101: #{transformer_encoder_layer.3} parent=99 // loop_pre_header
                  _
                $region102: #{transformer_encoder_layer.3} parent=99 // loop_header
                  %s501 = sphi 0, %s505
                  %p502 = scmp.ge.s32.totalorder %s501, 1
                  %s506 = sphi %s402, %s402
                  %s507 = sphi %s473, %s473
                $region103: #{transformer_encoder_layer.3} parent=99 // loop_header_branch
                  %504 = sbr.rel (%p502) target = $region107
                $region104: #{transformer_encoder_layer.3} parent=99 // loop_body
                  _
                $region105: #{transformer_encoder_layer.3} parent=99 // loop_footer
                  %s505 = sadd.s32 1, %s501
                $region106: #{transformer_encoder_layer.3} parent=99 // loop_footer_branch
                  %500 = sbr.rel target = $region102
                $region107: #{transformer_encoder_layer.3} parent=99 // loop_exit
                  _
                %s509 = ssub.s32 16, 1
                loop: start=0, step=1, limit=1
                $region108: #{transformer_encoder_layer.3} parent=99 // loop_pre_header
                  _
                $region109: #{transformer_encoder_layer.3} parent=99 // loop_header
                  %s511 = sphi 0, %s515
                  %p512 = scmp.ge.s32.totalorder %s511, 1
                  %s516 = sphi %s402, %s402
                  %s517 = sphi %s473, %s473
                $region110: #{transformer_encoder_layer.3} parent=99 // loop_header_branch
                  %514 = sbr.rel (%p512) target = $region114
                $region111: #{transformer_encoder_layer.3} parent=99 // loop_body
                  %v518 = vld [vmem:[%s516] sm:%s509]
                  %519 = vst [vmem:[%s517] sm:%s509] %v518
                  %v520 = vld [vmem:[%s516 + $0x4] sm:%s509]
                  %521 = vst [vmem:[%s517 + $0x8] sm:%s509] %v520
                  %v522 = vld [vmem:[%s516 + $0x8] sm:%s509]
                  %523 = vst [vmem:[%s517 + $0x10] sm:%s509] %v522
                  %v524 = vld [vmem:[%s516 + $0xc] sm:%s509]
                  %525 = vst [vmem:[%s517 + $0x18] sm:%s509] %v524
                $region112: #{transformer_encoder_layer.3} parent=99 // loop_footer
                  %s515 = sadd.s32 1, %s511
                $region113: #{transformer_encoder_layer.3} parent=99 // loop_footer_branch
                  %510 = sbr.rel target = $region109
                $region114: #{transformer_encoder_layer.3} parent=99 // loop_exit
                  _
              $region100: #{transformer_encoder_layer.3} parent=84 // pred_fallthru
                _
            $region85: #{transformer_encoder_layer.3} parent=80 // pred_fallthru
              _
            // Predicated region
            $region86: #{transformer_encoder_layer.3} parent=80 // pred_check
              _
            $region87: #{transformer_encoder_layer.3} parent=80 // pred_check_branch
              %479 = sbr.rel (0) target = $region89
            $region88: #{transformer_encoder_layer.3} parent=80 // pred_region
              %s481 = ssub.s32 16, 1
              loop: start=0, step=1, limit=1
              $region90: #{transformer_encoder_layer.3} parent=88 // loop_pre_header
                _
              $region91: #{transformer_encoder_layer.3} parent=88 // loop_header
                %s483 = sphi 0, %s487
                %p484 = scmp.ge.s32.totalorder %s483, 1
                %s488 = sphi %s402, %s402
                %s489 = sphi %s473, %s473
              $region92: #{transformer_encoder_layer.3} parent=88 // loop_header_branch
                %486 = sbr.rel (%p484) target = $region96
              $region93: #{transformer_encoder_layer.3} parent=88 // loop_body
                %v490 = vld [vmem:[%s488] sm:%s481]
                %491 = vst [vmem:[%s489] sm:%s481] %v490
                %v492 = vld [vmem:[%s488 + $0x4] sm:%s481]
                %493 = vst [vmem:[%s489 + $0x8] sm:%s481] %v492
                %v494 = vld [vmem:[%s488 + $0x8] sm:%s481]
                %495 = vst [vmem:[%s489 + $0x10] sm:%s481] %v494
                %v496 = vld [vmem:[%s488 + $0xc] sm:%s481]
                %497 = vst [vmem:[%s489 + $0x18] sm:%s481] %v496
              $region94: #{transformer_encoder_layer.3} parent=88 // loop_footer
                %s487 = sadd.s32 1, %s483
              $region95: #{transformer_encoder_layer.3} parent=88 // loop_footer_branch
                %482 = sbr.rel target = $region91
              $region96: #{transformer_encoder_layer.3} parent=88 // loop_exit
                _
            $region89: #{transformer_encoder_layer.3} parent=80 // pred_fallthru
              _
          $region81: #{transformer_encoder_layer.3} parent=76 // pred_fallthru
            _
          %526 = vnop
        $region77: #{transformer_encoder_layer.3} parent=31 // pred_fallthru
          _
        // Predicated region
        $region115: #{transformer_encoder_layer.3} parent=31 // pred_check
          %p527 = pneg %p175
        $region116: #{transformer_encoder_layer.3} parent=31 // pred_check_branch
          %529 = sbr.rel (%p527) target = $region118
        $region117: #{transformer_encoder_layer.3} parent=31 // pred_region
          %s530 = smul.addr %s21, 8
          %s531 = sadd.s32 %s22, %s530
          %s532 = smul.addr %s531, 4
          %s533 = scalar_lea.vmem %s5, %s532
          // Predicated region
          $region119: #{transformer_encoder_layer.3} parent=117 // pred_check
            _
          $region120: #{transformer_encoder_layer.3} parent=117 // pred_check_branch
            %535 = sbr.rel (0) target = $region122
          $region121: #{transformer_encoder_layer.3} parent=117 // pred_region
            // Predicated region
            $region123: #{transformer_encoder_layer.3} parent=121 // pred_check
              _
            $region124: #{transformer_encoder_layer.3} parent=121 // pred_check_branch
              %537 = sbr.rel target = $region126
            $region125: #{transformer_encoder_layer.3} parent=121 // pred_region
              // Predicated region
              $region138: #{transformer_encoder_layer.3} parent=125 // pred_check
                _
              $region139: #{transformer_encoder_layer.3} parent=125 // pred_check_branch
                %559 = sbr.rel (0) target = $region141
              $region140: #{transformer_encoder_layer.3} parent=125 // pred_region
                loop: start=0, step=1, limit=1
                $region142: #{transformer_encoder_layer.3} parent=140 // loop_pre_header
                  _
                $region143: #{transformer_encoder_layer.3} parent=140 // loop_header
                  %s561 = sphi 0, %s565
                  %p562 = scmp.ge.s32.totalorder %s561, 1
                  %s566 = sphi %s406, %s406
                  %s567 = sphi %s533, %s533
                $region144: #{transformer_encoder_layer.3} parent=140 // loop_header_branch
                  %564 = sbr.rel (%p562) target = $region148
                $region145: #{transformer_encoder_layer.3} parent=140 // loop_body
                  _
                $region146: #{transformer_encoder_layer.3} parent=140 // loop_footer
                  %s565 = sadd.s32 1, %s561
                $region147: #{transformer_encoder_layer.3} parent=140 // loop_footer_branch
                  %560 = sbr.rel target = $region143
                $region148: #{transformer_encoder_layer.3} parent=140 // loop_exit
                  _
                %s569 = ssub.s32 16, 1
                loop: start=0, step=1, limit=1
                $region149: #{transformer_encoder_layer.3} parent=140 // loop_pre_header
                  _
                $region150: #{transformer_encoder_layer.3} parent=140 // loop_header
                  %s571 = sphi 0, %s575
                  %p572 = scmp.ge.s32.totalorder %s571, 1
                  %s576 = sphi %s406, %s406
                  %s577 = sphi %s533, %s533
                $region151: #{transformer_encoder_layer.3} parent=140 // loop_header_branch
                  %574 = sbr.rel (%p572) target = $region155
                $region152: #{transformer_encoder_layer.3} parent=140 // loop_body
                  %v578 = vld [vmem:[%s576] sm:%s569]
                  %579 = vst [vmem:[%s577] sm:%s569] %v578
                  %v580 = vld [vmem:[%s576 + $0x4] sm:%s569]
                  %581 = vst [vmem:[%s577 + $0x8] sm:%s569] %v580
                  %v582 = vld [vmem:[%s576 + $0x8] sm:%s569]
                  %583 = vst [vmem:[%s577 + $0x10] sm:%s569] %v582
                  %v584 = vld [vmem:[%s576 + $0xc] sm:%s569]
                  %585 = vst [vmem:[%s577 + $0x18] sm:%s569] %v584
                $region153: #{transformer_encoder_layer.3} parent=140 // loop_footer
                  %s575 = sadd.s32 1, %s571
                $region154: #{transformer_encoder_layer.3} parent=140 // loop_footer_branch
                  %570 = sbr.rel target = $region150
                $region155: #{transformer_encoder_layer.3} parent=140 // loop_exit
                  _
              $region141: #{transformer_encoder_layer.3} parent=125 // pred_fallthru
                _
            $region126: #{transformer_encoder_layer.3} parent=121 // pred_fallthru
              _
            // Predicated region
            $region127: #{transformer_encoder_layer.3} parent=121 // pred_check
              _
            $region128: #{transformer_encoder_layer.3} parent=121 // pred_check_branch
              %539 = sbr.rel (0) target = $region130
            $region129: #{transformer_encoder_layer.3} parent=121 // pred_region
              %s541 = ssub.s32 16, 1
              loop: start=0, step=1, limit=1
              $region131: #{transformer_encoder_layer.3} parent=129 // loop_pre_header
                _
              $region132: #{transformer_encoder_layer.3} parent=129 // loop_header
                %s543 = sphi 0, %s547
                %p544 = scmp.ge.s32.totalorder %s543, 1
                %s548 = sphi %s406, %s406
                %s549 = sphi %s533, %s533
              $region133: #{transformer_encoder_layer.3} parent=129 // loop_header_branch
                %546 = sbr.rel (%p544) target = $region137
              $region134: #{transformer_encoder_layer.3} parent=129 // loop_body
                %v550 = vld [vmem:[%s548] sm:%s541]
                %551 = vst [vmem:[%s549] sm:%s541] %v550
                %v552 = vld [vmem:[%s548 + $0x4] sm:%s541]
                %553 = vst [vmem:[%s549 + $0x8] sm:%s541] %v552
                %v554 = vld [vmem:[%s548 + $0x8] sm:%s541]
                %555 = vst [vmem:[%s549 + $0x10] sm:%s541] %v554
                %v556 = vld [vmem:[%s548 + $0xc] sm:%s541]
                %557 = vst [vmem:[%s549 + $0x18] sm:%s541] %v556
              $region135: #{transformer_encoder_layer.3} parent=129 // loop_footer
                %s547 = sadd.s32 1, %s543
              $region136: #{transformer_encoder_layer.3} parent=129 // loop_footer_branch
                %542 = sbr.rel target = $region132
              $region137: #{transformer_encoder_layer.3} parent=129 // loop_exit
                _
            $region130: #{transformer_encoder_layer.3} parent=121 // pred_fallthru
              _
          $region122: #{transformer_encoder_layer.3} parent=117 // pred_fallthru
            _
          %586 = vnop
        $region118: #{transformer_encoder_layer.3} parent=31 // pred_fallthru
          _
      $region32: #{transformer_encoder_layer.3} parent=5 // pred_fallthru
        _
      %p587 = scmp.le.s32.totalorder 2, %s12
      // Predicated region
      $region156: #{transformer_encoder_layer.3} parent=5 // pred_check
        %p588 = pneg %p587
      $region157: #{transformer_encoder_layer.3} parent=5 // pred_check_branch
        %590 = sbr.rel (%p588) target = $region159
      $region158: #{transformer_encoder_layer.3} parent=5 // pred_region
        %s591 = ssub.s32 %s12, 2
        // Predicated region
        $region160: #{transformer_encoder_layer.3} parent=158 // pred_check
          %p592 = pneg %p125
        $region161: #{transformer_encoder_layer.3} parent=158 // pred_check_branch
          %594 = sbr.rel (%p592) target = $region163
        $region162: #{transformer_encoder_layer.3} parent=158 // pred_region
          %s595 = sand.u32 %s110, 1
          %s596 = sand.u32 %s110, 1
          %s597 = smul.addr %s596, 16
          %s598 = scalar_lea.vmem [#allocation2], %s597
        $region163: #{transformer_encoder_layer.3} parent=158 // pred_fallthru
          _
        // Predicated region
        $region164: #{transformer_encoder_layer.3} parent=158 // pred_check
          %p599 = pneg %p153
        $region165: #{transformer_encoder_layer.3} parent=158 // pred_check_branch
          %601 = sbr.rel (%p599) target = $region167
        $region166: #{transformer_encoder_layer.3} parent=158 // pred_region
          %s602 = sand.u32 %s138, 1
          %s603 = sand.u32 %s138, 1
          %s604 = smul.addr %s603, 16
          %s605 = scalar_lea.vmem [#allocation3], %s604
        $region167: #{transformer_encoder_layer.3} parent=158 // pred_fallthru
          _
        // Predicated region
        $region168: #{transformer_encoder_layer.3} parent=158 // pred_check
          %p606 = pneg %p181
        $region169: #{transformer_encoder_layer.3} parent=158 // pred_check_branch
          %608 = sbr.rel (%p606) target = $region171
        $region170: #{transformer_encoder_layer.3} parent=158 // pred_region
          %s609 = sand.u32 %s166, 1
          %s610 = sand.u32 %s166, 1
          %s611 = smul.addr %s610, 16
          %s612 = scalar_lea.vmem [#allocation4], %s611
        $region171: #{transformer_encoder_layer.3} parent=158 // pred_fallthru
          _
      $region159: #{transformer_encoder_layer.3} parent=5 // pred_fallthru
        _
    $region6: #{transformer_encoder_layer.3} parent=1 // loop_footer
      %s16 = sadd.s32 1, %s12
    $region7: #{transformer_encoder_layer.3} parent=1 // loop_footer_branch
      %11 = sbr.rel target = $region3
    $region8: #{transformer_encoder_layer.3} parent=1 // loop_exit
      _

// kernel: transformer_encoder_layer.4
$region0: #{transformer_encoder_layer.4}
  #allocation0 [shape = 'u32[]', space=smem, size = 0x4, offset = 0x4, fixed_abs, tag = 'smem constant byte address 0x4 - core index']
  #allocation1 [shape = 'u32[144,128]{1,0:T(1,128)}', space=vmem, size = 0x12000, scoped, tag = 'internal scratch']
  #allocation2 [shape = 'f32[8,1]{1,0:T(8,128)}', space=vmem, size = 0x1000, scoped, tag = 'scratch operand']
  #allocation3 [shape = 'f32[8,1]{1,0:T(8,128)}', space=vmem, size = 0x1000, scoped, tag = 'scratch operand']
  #allocation4 [shape = 'f32[8,8]{1,0:T(8,128)}', space=vmem, size = 0x1000, scoped, tag = 'scratch operand']
  #allocation5 [shape = 'f32[8,32]{1,0:T(8,128)}', space=vmem, size = 0x1000, scoped, tag = 'scratch operand']
  %s0 = inlined_call_operand.vmem [shape: bf16[2,4,16,8], index: 0, kind: input, shape index: {}]
  %s1 = inlined_call_operand.vmem [shape: bf16[2,4,16,8], index: 1, kind: input, shape index: {}]
  %s2 = inlined_call_operand.vmem [shape: bf16[2,4,16,8], index: 2, kind: input, shape index: {}]
  %s3 = inlined_call_operand.vmem [shape: bf16[4,8,32], index: 3, kind: input, shape index: {}]
  %s4 = inlined_call_operand.vmem [shape: f32[1,32], index: 4, kind: input, shape index: {}]
  %s5 = inlined_call_operand.vmem [shape: f32[2,16,32], index: 5, kind: output, shape index: {}]
  %s6 = sld [smem:[#allocation0]]
  $region69: #{transformer_encoder_layer.4} parent=0
    _
  %s8 = ssub.s32 1, %s6
  %s9 = scalar_select 0, %s8, %s6
  loop: start=0, step=1, limit=34
  $region2: #{transformer_encoder_layer.4} parent=0 // loop_pre_header
    _
  $region3: #{transformer_encoder_layer.4} parent=0 // loop_header
    %s11 = sphi 0, %s15
    %p12 = scmp.ge.s32.totalorder %s11, 34
    %s18 = sphi 0, %s44
    %s19 = sphi 0, %s40
    %s20 = sphi 0, %s36
    %s21 = sphi 0, %s32
    %s22 = sphi 0, %s18
    %s23 = sphi 0, %s19
    %s24 = sphi 0, %s20
    %s25 = sphi 0, %s21
    %s26 = sphi 0, %s22
    %s27 = sphi 0, %s23
    %s28 = sphi 0, %s24
    %s29 = sphi 0, %s25
    %s51 = sphi 0, %s53
    %s54 = sphi 0, %s51
    %s55 = sphi 0, %s54
    %s71 = sphi 0, %s55
    %s81 = sphi 0, %s83
    %s84 = sphi 0, %s81
    %s85 = sphi 0, %s84
    %s101 = sphi 0, %s85
    %s111 = sphi 0, %s113
    %s114 = sphi 0, %s111
    %s115 = sphi 0, %s114
    %s131 = sphi 0, %s115
    %s137 = sphi 0, %s139
    %s140 = sphi 0, %s137
    %s141 = sphi 0, %s140
    %s157 = sphi 0, %s141
    %s161 = sphi 0, %s161
    %s163 = sphi 0, %s161
    %s164 = sphi 0, %s163
    %s178 = sphi 0, %s164
    %s186 = sphi 0, %s188
    %s189 = sphi 0, %s186
    %s190 = sphi 0, %s189
    %s206 = sphi 0, %s190
  $region4: #{transformer_encoder_layer.4} parent=0 // loop_header_branch
    %14 = sbr.rel (%p12) target = $region8
  $region5: #{transformer_encoder_layer.4} parent=0 // loop_body
    %s16 = ssub.s32 %s11, 1
    %s17 = ssub.s32 %s11, 2
    %s30 = sadd.s32 1, %s21
    %p31 = scmp.ge.s32.totalorder %s30, 2
    %s32 = scalar_select %p31, 0, %s30
    %s33 = sadd.s32 1, %s20
    %s34 = scalar_select %p31, %s33, %s20
    %p35 = scmp.ge.s32.totalorder %s34, 4
    %s36 = scalar_select %p35, 0, %s34
    %s37 = sadd.s32 1, %s19
    %s38 = scalar_select %p35, %s37, %s19
    %p39 = scmp.ge.s32.totalorder %s38, 2
    %s40 = scalar_select %p39, 0, %s38
    %s41 = sadd.s32 1, %s18
    %s42 = scalar_select %p39, %s41, %s18
    %p43 = scmp.ge.s32.totalorder %s42, 2
    %s44 = scalar_select %p43, 0, %s42
    %s45 = ssub.s32 %s18, %s44
    %s46 = ssub.s32 %s20, %s36
    %s47 = sor.u32 %s45, %s46
    %s48 = ssub.s32 %s19, %s40
    %s49 = sor.u32 %s47, %s48
    %p50 = scmp.eq.s32.totalorder %s49, 0
    %s52 = sadd.s32 %s51, 1
    %s53 = scalar_select %p50, %s51, %s52
    %p56 = pneg %p50
    %p57 = scmp.eq.s32.totalorder %s11, 31
    %p58 = por %p56, %p57
    %p59 = scmp.ne.s32.totalorder %s51, %s54
    %p60 = scmp.eq.s32.totalorder %s11, 0
    %p61 = por %p59, %p60
    %p62 = scmp.ne.s32.totalorder %s51, %s54
    %p63 = scmp.eq.s32.totalorder %s16, 31
    %p64 = por %p62, %p63
    %p65 = scmp.ne.s32.totalorder %s54, %s55
    %p66 = scmp.eq.s32.totalorder %s16, 0
    %p67 = por %p65, %p66
    %p68 = scmp.ne.s32.totalorder %s54, %s55
    %p69 = scmp.eq.s32.totalorder %s17, 31
    %p70 = por %p68, %p69
    %p72 = scmp.ne.s32.totalorder %s55, %s71
    %p73 = scmp.eq.s32.totalorder %s17, 0
    %p74 = por %p72, %p73
    %s75 = ssub.s32 %s18, %s44
    %s76 = ssub.s32 %s20, %s36
    %s77 = sor.u32 %s75, %s76
    %s78 = ssub.s32 %s21, %s32
    %s79 = sor.u32 %s77, %s78
    %p80 = scmp.eq.s32.totalorder %s79, 0
    %s82 = sadd.s32 %s81, 1
    %s83 = scalar_select %p80, %s81, %s82
    %p86 = pneg %p80
    %p87 = scmp.eq.s32.totalorder %s11, 31
    %p88 = por %p86, %p87
    %p89 = scmp.ne.s32.totalorder %s81, %s84
    %p90 = scmp.eq.s32.totalorder %s11, 0
    %p91 = por %p89, %p90
    %p92 = scmp.ne.s32.totalorder %s81, %s84
    %p93 = scmp.eq.s32.totalorder %s16, 31
    %p94 = por %p92, %p93
    %p95 = scmp.ne.s32.totalorder %s84, %s85
    %p96 = scmp.eq.s32.totalorder %s16, 0
    %p97 = por %p95, %p96
    %p98 = scmp.ne.s32.totalorder %s84, %s85
    %p99 = scmp.eq.s32.totalorder %s17, 31
    %p100 = por %p98, %p99
    %p102 = scmp.ne.s32.totalorder %s85, %s101
    %p103 = scmp.eq.s32.totalorder %s17, 0
    %p104 = por %p102, %p103
    %s105 = ssub.s32 %s18, %s44
    %s106 = ssub.s32 %s20, %s36
    %s107 = sor.u32 %s105, %s106
    %s108 = ssub.s32 %s21, %s32
    %s109 = sor.u32 %s107, %s108
    %p110 = scmp.eq.s32.totalorder %s109, 0
    %s112 = sadd.s32 %s111, 1
    %s113 = scalar_select %p110, %s111, %s112
    %p116 = pneg %p110
    %p117 = scmp.eq.s32.totalorder %s11, 31
    %p118 = por %p116, %p117
    %p119 = scmp.ne.s32.totalorder %s111, %s114
    %p120 = scmp.eq.s32.totalorder %s11, 0
    %p121 = por %p119, %p120
    %p122 = scmp.ne.s32.totalorder %s111, %s114
    %p123 = scmp.eq.s32.totalorder %s16, 31
    %p124 = por %p122, %p123
    %p125 = scmp.ne.s32.totalorder %s114, %s115
    %p126 = scmp.eq.s32.totalorder %s16, 0
    %p127 = por %p125, %p126
    %p128 = scmp.ne.s32.totalorder %s114, %s115
    %p129 = scmp.eq.s32.totalorder %s17, 31
    %p130 = por %p128, %p129
    %p132 = scmp.ne.s32.totalorder %s115, %s131
    %p133 = scmp.eq.s32.totalorder %s17, 0
    %p134 = por %p132, %p133
    %s135 = ssub.s32 %s20, %s36
    %p136 = scmp.eq.s32.totalorder %s135, 0
    %s138 = sadd.s32 %s137, 1
    %s139 = scalar_select %p136, %s137, %s138
    %p142 = pneg %p136
    %p143 = scmp.eq.s32.totalorder %s11, 31
    %p144 = por %p142, %p143
    %p145 = scmp.ne.s32.totalorder %s137, %s140
    %p146 = scmp.eq.s32.totalorder %s11, 0
    %p147 = por %p145, %p146
    %p148 = scmp.ne.s32.totalorder %s137, %s140
    %p149 = scmp.eq.s32.totalorder %s16, 31
    %p150 = por %p148, %p149
    %p151 = scmp.ne.s32.totalorder %s140, %s141
    %p152 = scmp.eq.s32.totalorder %s16, 0
    %p153 = por %p151, %p152
    %p154 = scmp.ne.s32.totalorder %s140, %s141
    %p155 = scmp.eq.s32.totalorder %s17, 31
    %p156 = por %p154, %p155
    %p158 = scmp.ne.s32.totalorder %s141, %s157
    %p159 = scmp.eq.s32.totalorder %s17, 0
    %p160 = por %p158, %p159
    %s162 = sadd.s32 %s161, 1
    %p165 = scmp.eq.s32.totalorder %s11, 31
    %p166 = scmp.ne.s32.totalorder %s161, %s163
    %p167 = scmp.eq.s32.totalorder %s11, 0
    %p168 = por %p166, %p167
    %p169 = scmp.ne.s32.totalorder %s161, %s163
    %p170 = scmp.eq.s32.totalorder %s16, 31
    %p171 = por %p169, %p170
    %p172 = scmp.ne.s32.totalorder %s163, %s164
    %p173 = scmp.eq.s32.totalorder %s16, 0
    %p174 = por %p172, %p173
    %p175 = scmp.ne.s32.totalorder %s163, %s164
    %p176 = scmp.eq.s32.totalorder %s17, 31
    %p177 = por %p175, %p176
    %p179 = scmp.ne.s32.totalorder %s164, %s178
    %p180 = scmp.eq.s32.totalorder %s17, 0
    %p181 = por %p179, %p180
    %s182 = ssub.s32 %s18, %s44
    %s183 = ssub.s32 %s19, %s40
    %s184 = sor.u32 %s182, %s183
    %p185 = scmp.eq.s32.totalorder %s184, 0
    %s187 = sadd.s32 %s186, 1
    %s188 = scalar_select %p185, %s186, %s187
    %p191 = pneg %p185
    %p192 = scmp.eq.s32.totalorder %s11, 31
    %p193 = por %p191, %p192
    %p194 = scmp.ne.s32.totalorder %s186, %s189
    %p195 = scmp.eq.s32.totalorder %s11, 0
    %p196 = por %p194, %p195
    %p197 = scmp.ne.s32.totalorder %s186, %s189
    %p198 = scmp.eq.s32.totalorder %s16, 31
    %p199 = por %p197, %p198
    %p200 = scmp.ne.s32.totalorder %s189, %s190
    %p201 = scmp.eq.s32.totalorder %s16, 0
    %p202 = por %p200, %p201
    %p203 = scmp.ne.s32.totalorder %s189, %s190
    %p204 = scmp.eq.s32.totalorder %s17, 31
    %p205 = por %p203, %p204
    %p207 = scmp.ne.s32.totalorder %s190, %s206
    %p208 = scmp.eq.s32.totalorder %s17, 0
    %p209 = por %p207, %p208
    %p210 = scmp.le.s32.totalorder 1, %s11
    %p211 = scmp.lt.s32.totalorder %s11, 33
    %p212 = pnand %p210, %p211
    %p213 = pneg %p212
    // Predicated region
    $region9: #{transformer_encoder_layer.4} parent=5 // pred_check
      _
    $region10: #{transformer_encoder_layer.4} parent=5 // pred_check_branch
      %215 = sbr.rel (%p212) target = $region12
    $region11: #{transformer_encoder_layer.4} parent=5 // pred_region
      %s216 = ssub.s32 %s11, 1
      // Predicated region
      $region13: #{transformer_encoder_layer.4} parent=11 // pred_check
        %p217 = pneg %p174
      $region14: #{transformer_encoder_layer.4} parent=11 // pred_check_branch
        %219 = sbr.rel (%p217) target = $region16
      $region15: #{transformer_encoder_layer.4} parent=11 // pred_region
        _
      $region16: #{transformer_encoder_layer.4} parent=11 // pred_fallthru
        _
    $region12: #{transformer_encoder_layer.4} parent=5 // pred_fallthru
      _
    %p220 = scmp.lt.s32.totalorder %s11, 32
    // Predicated region
    $region17: #{transformer_encoder_layer.4} parent=5 // pred_check
      %p221 = pneg %p220
    $region18: #{transformer_encoder_layer.4} parent=5 // pred_check_branch
      %223 = sbr.rel (%p221) target = $region20
    $region19: #{transformer_encoder_layer.4} parent=5 // pred_region
      // Predicated region
      $region21: #{transformer_encoder_layer.4} parent=19 // pred_check
        %p224 = pneg %p61
      $region22: #{transformer_encoder_layer.4} parent=19 // pred_check_branch
        %226 = sbr.rel (%p224) target = $region24
      $region23: #{transformer_encoder_layer.4} parent=19 // pred_region
        %p227 = scmp.lt.s32.totalorder %s18, 1
        %s228 = scalar_select %p227, %s18, 1
        %p229 = scmp.lt.s32.totalorder %s20, 3
        %s230 = scalar_select %p229, %s20, 3
        %p231 = scmp.lt.s32.totalorder %s19, 1
        %s232 = scalar_select %p231, %s19, 1
        %s233 = smul.addr %s230, 2
        %s234 = sadd.s32 %s232, %s233
        %s235 = smul.addr %s228, 8
        %s236 = sadd.s32 %s234, %s235
        %s237 = smul.addr %s236, 4
        %s238 = scalar_lea.vmem %s0, %s237
      $region24: #{transformer_encoder_layer.4} parent=19 // pred_fallthru
        _
      // Predicated region
      $region25: #{transformer_encoder_layer.4} parent=19 // pred_check
        %p239 = pneg %p91
      $region26: #{transformer_encoder_layer.4} parent=19 // pred_check_branch
        %241 = sbr.rel (%p239) target = $region28
      $region27: #{transformer_encoder_layer.4} parent=19 // pred_region
        %p242 = scmp.lt.s32.totalorder %s18, 1
        %s243 = scalar_select %p242, %s18, 1
        %p244 = scmp.lt.s32.totalorder %s20, 3
        %s245 = scalar_select %p244, %s20, 3
        %p246 = scmp.lt.s32.totalorder %s21, 1
        %s247 = scalar_select %p246, %s21, 1
        %s248 = smul.addr %s245, 2
        %s249 = sadd.s32 %s247, %s248
        %s250 = smul.addr %s243, 8
        %s251 = sadd.s32 %s249, %s250
        %s252 = smul.addr %s251, 4
        %s253 = scalar_lea.vmem %s1, %s252
      $region28: #{transformer_encoder_layer.4} parent=19 // pred_fallthru
        _
      // Predicated region
      $region29: #{transformer_encoder_layer.4} parent=19 // pred_check
        %p254 = pneg %p121
      $region30: #{transformer_encoder_layer.4} parent=19 // pred_check_branch
        %256 = sbr.rel (%p254) target = $region32
      $region31: #{transformer_encoder_layer.4} parent=19 // pred_region
        %p257 = scmp.lt.s32.totalorder %s18, 1
        %s258 = scalar_select %p257, %s18, 1
        %p259 = scmp.lt.s32.totalorder %s20, 3
        %s260 = scalar_select %p259, %s20, 3
        %p261 = scmp.lt.s32.totalorder %s21, 1
        %s262 = scalar_select %p261, %s21, 1
        %s263 = smul.addr %s260, 2
        %s264 = sadd.s32 %s262, %s263
        %s265 = smul.addr %s258, 8
        %s266 = sadd.s32 %s264, %s265
        %s267 = smul.addr %s266, 4
        %s268 = scalar_lea.vmem %s2, %s267
      $region32: #{transformer_encoder_layer.4} parent=19 // pred_fallthru
        _
      // Predicated region
      $region33: #{transformer_encoder_layer.4} parent=19 // pred_check
        %p269 = pneg %p147
      $region34: #{transformer_encoder_layer.4} parent=19 // pred_check_branch
        %271 = sbr.rel (%p269) target = $region36
      $region35: #{transformer_encoder_layer.4} parent=19 // pred_region
        %p272 = scmp.lt.s32.totalorder %s20, 3
        %s273 = scalar_select %p272, %s20, 3
        %s274 = smul.addr %s273, 4
        %s275 = scalar_lea.vmem %s3, %s274
      $region36: #{transformer_encoder_layer.4} parent=19 // pred_fallthru
        _
    $region20: #{transformer_encoder_layer.4} parent=5 // pred_fallthru
      _
    %p276 = scmp.le.s32.totalorder 1, %s11
    %p277 = scmp.lt.s32.totalorder %s11, 33
    %p278 = pnand %p276, %p277
    %p279 = pneg %p278
    // Predicated region
    $region37: #{transformer_encoder_layer.4} parent=5 // pred_check
      _
    $region38: #{transformer_encoder_layer.4} parent=5 // pred_check_branch
      %281 = sbr.rel (%p278) target = $region40
    $region39: #{transformer_encoder_layer.4} parent=5 // pred_region
      %s282 = ssub.s32 %s11, 1
      %p283 = scmp.lt.s32.totalorder %s22, 1
      %s284 = scalar_select %p283, %s22, 1
      %p285 = scmp.lt.s32.totalorder %s24, 3
      %s286 = scalar_select %p285, %s24, 3
      %p287 = scmp.lt.s32.totalorder %s23, 1
      %s288 = scalar_select %p287, %s23, 1
      %s289 = smul.addr %s286, 2
      %s290 = sadd.s32 %s288, %s289
      %s291 = smul.addr %s284, 8
      %s292 = sadd.s32 %s290, %s291
      %s293 = smul.addr %s292, 4
      %s294 = scalar_lea.vmem %s0, %s293
      %p295 = pneg %p67
      %p296 = pneg %p64
      %p297 = scmp.lt.s32.totalorder %s22, 1
      %s298 = scalar_select %p297, %s22, 1
      %p299 = scmp.lt.s32.totalorder %s24, 3
      %s300 = scalar_select %p299, %s24, 3
      %p301 = scmp.lt.s32.totalorder %s25, 1
      %s302 = scalar_select %p301, %s25, 1
      %s303 = smul.addr %s300, 2
      %s304 = sadd.s32 %s302, %s303
      %s305 = smul.addr %s298, 8
      %s306 = sadd.s32 %s304, %s305
      %s307 = smul.addr %s306, 4
      %s308 = scalar_lea.vmem %s1, %s307
      %p309 = pneg %p97
      %p310 = pneg %p94
      %p311 = scmp.lt.s32.totalorder %s22, 1
      %s312 = scalar_select %p311, %s22, 1
      %p313 = scmp.lt.s32.totalorder %s24, 3
      %s314 = scalar_select %p313, %s24, 3
      %p315 = scmp.lt.s32.totalorder %s25, 1
      %s316 = scalar_select %p315, %s25, 1
      %s317 = smul.addr %s314, 2
      %s318 = sadd.s32 %s316, %s317
      %s319 = smul.addr %s312, 8
      %s320 = sadd.s32 %s318, %s319
      %s321 = smul.addr %s320, 4
      %s322 = scalar_lea.vmem %s2, %s321
      %p323 = pneg %p127
      %p324 = pneg %p124
      %p325 = scmp.lt.s32.totalorder %s24, 3
      %s326 = scalar_select %p325, %s24, 3
      %s327 = smul.addr %s326, 4
      %s328 = scalar_lea.vmem %s3, %s327
      %p329 = pneg %p153
      %p330 = pneg %p150
      %p331 = pneg %p174
      %p332 = pneg %p171
      %p333 = pneg %p202
      %p334 = pneg %p199
      %p335 = scmp.lt.s32.totalorder %s22, 1
      %s336 = scalar_select %p335, %s22, 1
      %p337 = scmp.lt.s32.totalorder %s23, 1
      %s338 = scalar_select %p337, %s23, 1
      %s339 = smul.addr %s336, 2
      %s340 = sadd.s32 %s338, %s339
      %s341 = smul.addr %s340, 8
      %s342 = scalar_lea.vmem %s5, %s341
      %p343 = scmp.lt.s32.totalorder %s22, 1
      %s344 = scalar_select %p343, %s22, 1
      %p345 = scmp.lt.s32.totalorder %s24, 3
      %s346 = scalar_select %p345, %s24, 3
      %p347 = scmp.lt.s32.totalorder %s23, 1
      %s348 = scalar_select %p347, %s23, 1
      %s349 = smul.addr %s346, 2
      %s350 = sadd.s32 %s348, %s349
      %s351 = smul.addr %s344, 8
      %s352 = sadd.s32 %s350, %s351
      %s353 = smul.addr %s352, 4
      %s354 = scalar_lea.vmem %s0, %s353
      %p355 = scmp.lt.s32.totalorder %s22, 1
      %s356 = scalar_select %p355, %s22, 1
      %p357 = scmp.lt.s32.totalorder %s24, 3
      %s358 = scalar_select %p357, %s24, 3
      %p359 = scmp.lt.s32.totalorder %s25, 1
      %s360 = scalar_select %p359, %s25, 1
      %s361 = smul.addr %s358, 2
      %s362 = sadd.s32 %s360, %s361
      %s363 = smul.addr %s356, 8
      %s364 = sadd.s32 %s362, %s363
      %s365 = smul.addr %s364, 4
      %s366 = scalar_lea.vmem %s1, %s365
      %p367 = scmp.lt.s32.totalorder %s22, 1
      %s368 = scalar_select %p367, %s22, 1
      %p369 = scmp.lt.s32.totalorder %s24, 3
      %s370 = scalar_select %p369, %s24, 3
      %p371 = scmp.lt.s32.totalorder %s25, 1
      %s372 = scalar_select %p371, %s25, 1
      %s373 = smul.addr %s370, 2
      %s374 = sadd.s32 %s372, %s373
      %s375 = smul.addr %s368, 8
      %s376 = sadd.s32 %s374, %s375
      %s377 = smul.addr %s376, 4
      %s378 = scalar_lea.vmem %s2, %s377
      %p379 = scmp.lt.s32.totalorder %s24, 3
      %s380 = scalar_select %p379, %s24, 3
      %s381 = smul.addr %s380, 4
      %s382 = scalar_lea.vmem %s3, %s381
      %p383 = scmp.lt.s32.totalorder %s22, 1
      %s384 = scalar_select %p383, %s22, 1
      %p385 = scmp.lt.s32.totalorder %s23, 1
      %s386 = scalar_select %p385, %s23, 1
      %s387 = smul.addr %s384, 2
      %s388 = sadd.s32 %s386, %s387
      %s389 = smul.addr %s388, 8
      %s390 = scalar_lea.vmem %s5, %s389
      %p392 = scmp.eq.s32.totalorder %s25, 0
      // Predicated region
      $region41: #{transformer_encoder_layer.4} parent=39 // pred_check
        %p393 = pneg %p392
      $region42: #{transformer_encoder_layer.4} parent=39 // pred_check_branch
        %395 = sbr.rel (%p393) target = $region44
      $region43: #{transformer_encoder_layer.4} parent=39 // pred_region
        %vm396 = vcmask 7168
        %397 = vst.msk [vmem:[#allocation2] sm:$0xff] %vm396, -inf
        %398 = vst.msk [vmem:[#allocation3] sm:$0xff] %vm396, 0.0
        %vm399 = vcmask 64512
        %400 = vst.msk [vmem:[#allocation4] sm:$0xff] %vm399, 0.0
      $region44: #{transformer_encoder_layer.4} parent=39 // pred_fallthru
        _
      %p401 = scmp.eq.s32.totalorder %s24, 0
      %p402 = pnand %p401, %p392
      %p403 = pneg %p402
      // Predicated region
      $region45: #{transformer_encoder_layer.4} parent=39 // pred_check
        _
      $region46: #{transformer_encoder_layer.4} parent=39 // pred_check_branch
        %405 = sbr.rel (%p402) target = $region48
      $region47: #{transformer_encoder_layer.4} parent=39 // pred_region
        %vm406 = vcmask 261120
        %407 = vst.msk [vmem:[#allocation5] sm:$0xff] %vm406, 0.0
      $region48: #{transformer_encoder_layer.4} parent=39 // pred_fallthru
        _
      %v408 = vld [vmem:[%s354] sm:$0xf]
      %v409 = vld [vmem:[%s366] sm:$0xf]
      %v410 = vld [vmem:[%s378] sm:$0xf]
      %vm411 = vcmask 64512
      %v413 = vsel %vm411, %v408, 0
      %v416 = vsel %vm411, %v409, 0
      %418 = vmatprep.subr.bf16.mxu0 0
      %419 = vmatpush1.bf16.xpose.msra.mxu0 0
      %420 = vmatprep.subr.bf16.mxu0 0
      %421 = vmatpush1.bf16.xpose.msra.mxu0 0
      %422 = vmatprep.subr.bf16.mxu0 0
      %423 = vmatpush1.bf16.xpose.msra.mxu0 0
      %424 = vmatprep.subr.bf16.mxu0 0
      %425 = vmatpush1.bf16.xpose.msra.mxu0 0
      %426 = vmatprep.subr.bf16.mxu0 0
      %427 = vmatpush1.bf16.xpose.msra.mxu0 0
      %428 = vmatprep.subr.bf16.mxu0 0
      %429 = vmatpush1.bf16.xpose.msra.mxu0 0
      %430 = vmatprep.subr.bf16.mxu0 0
      %431 = vmatpush1.bf16.xpose.msra.mxu0 0
      %432 = vmatprep.subr.bf16.mxu0 0
      %433 = vmatpush1.bf16.xpose.msra.mxu0 %v416
      %434 = vmatprep.subr.bf16.mxu0 0
      %435 = vmatpush2.bf16.xpose.msra.mxu0 0
      %436 = vmatprep.subr.bf16.mxu0 0
      %437 = vmatpush2.bf16.xpose.msra.mxu0 0
      %438 = vmatprep.subr.bf16.mxu0 0
      %439 = vmatpush2.bf16.xpose.msra.mxu0 0
      %440 = vmatprep.subr.bf16.mxu0 0
      %441 = vmatpush2.bf16.xpose.msra.mxu0 0
      %442 = vmatprep.subr.bf16.mxu0 0
      %443 = vmatpush2.bf16.xpose.msra.mxu0 0
      %444 = vmatprep.subr.bf16.mxu0 0
      %445 = vmatpush2.bf16.xpose.msra.mxu0 0
      %446 = vmatprep.subr.bf16.mxu0 0
      %447 = vmatpush2.bf16.xpose.msra.mxu0 0
      %448 = vmatprep.subr.bf16.mxu0 0
      %449 = vmatpush2.bf16.xpose.msra.mxu0 0
      %450 = vmatprep.mubr.bf16.mxu0 0
      %451 = vmatmul.mubr.bf16.gmra.mxu0 %v413
      %v452 = vpop.f32.mrf.mxu0
      %v453 = vadd.f32 0.0, %v452
      %v454 = vpop.f32.mrf.mxu0
      %v455 = vpop.f32.mrf.mxu0
      %v456 = vpop.f32.mrf.mxu0
      %457 = vdwg.mxu0
      %v458 = vld [vmem:[#allocation2] sm:$0xff]
      %v459 = vsel %vm411, %v453, -inf
      %460 = vmax.xlane.f32.xlu0 %v459
      %v461 = vpop.xlane.xlu0 %460
      %v462 = vmax.f32 %v458, %v461
      %v463 = vsub.f32 %v458, %v462
      %v464 = vmul.f32 %v463, 1.442695
      %v465 = vpow.pop %v464
      %467 = vset.pattern.permute.xlu0 0
      %468 = vperm.xlu0 %467, %v462
      %v469 = vpop.permute.xlu0 %468
      %v471 = vsub.f32 %v453, %v469
      %v472 = vmul.f32 %v471, 1.442695
      %v473 = vpow.pop %v472
      %v474 = vld [vmem:[#allocation3] sm:$0xff]
      %v475 = vmul.f32 %v465, %v474
      %v476 = vsel %vm411, %v473, 0.0
      %477 = vadd.xlane.f32.xlu0 %v476
      %v478 = vpop.xlane.xlu0 %477
      %v479 = vadd.f32 %v475, %v478
      %vm480 = vcmask 7168
      %481 = vst.msk [vmem:[#allocation3] sm:$0xff] %vm480, %v479
      %v482 = vld [vmem:[#allocation4] sm:$0xff]
      %484 = vset.pattern.permute.xlu0 0
      %485 = vperm.xlu0 %484, %v465
      %v486 = vpop.permute.xlu0 %485
      %v488 = vmul.f32 %v486, %v482
      %v489 = vpack.c.bf16 %v473, %v473
      %v491 = vsel %vm411, %v489, 0
      %vm493 = vcmask 1043456
      %v495 = vsel %vm493, %v410, 0
      %497 = vmatprep.subr.bf16.mxu0 0
      %498 = vmatpush1.bf16.msra.mxu0 0
      %499 = vmatprep.subr.bf16.mxu0 0
      %500 = vmatpush1.bf16.msra.mxu0 0
      %501 = vmatprep.subr.bf16.mxu0 0
      %502 = vmatpush1.bf16.msra.mxu0 0
      %503 = vmatprep.subr.bf16.mxu0 0
      %504 = vmatpush1.bf16.msra.mxu0 0
      %505 = vmatprep.subr.bf16.mxu0 0
      %506 = vmatpush1.bf16.msra.mxu0 0
      %507 = vmatprep.subr.bf16.mxu0 0
      %508 = vmatpush1.bf16.msra.mxu0 0
      %509 = vmatprep.subr.bf16.mxu0 0
      %510 = vmatpush1.bf16.msra.mxu0 0
      %511 = vmatprep.subr.bf16.mxu0 0
      %512 = vmatpush1.bf16.msra.mxu0 %v495
      %513 = vmatprep.subr.bf16.mxu0 0
      %514 = vmatpush2.bf16.msra.mxu0 0
      %515 = vmatprep.subr.bf16.mxu0 0
      %516 = vmatpush2.bf16.msra.mxu0 0
      %517 = vmatprep.subr.bf16.mxu0 0
      %518 = vmatpush2.bf16.msra.mxu0 0
      %519 = vmatprep.subr.bf16.mxu0 0
      %520 = vmatpush2.bf16.msra.mxu0 0
      %521 = vmatprep.subr.bf16.mxu0 0
      %522 = vmatpush2.bf16.msra.mxu0 0
      %523 = vmatprep.subr.bf16.mxu0 0
      %524 = vmatpush2.bf16.msra.mxu0 0
      %525 = vmatprep.subr.bf16.mxu0 0
      %526 = vmatpush2.bf16.msra.mxu0 0
      %527 = vmatprep.subr.bf16.mxu0 0
      %528 = vmatpush2.bf16.msra.mxu0 0
      %529 = vmatprep.mubr.bf16.mxu0 0
      %530 = vmatmul.mubr.bf16.gmra.mxu0 %v491
      %v531 = vpop.f32.mrf.mxu0
      %v532 = vadd.f32 0.0, %v531
      %v533 = vpop.f32.mrf.mxu0
      %v534 = vpop.f32.mrf.mxu0
      %v535 = vpop.f32.mrf.mxu0
      %536 = vdwg.mxu0
      %v537 = vadd.f32 %v488, %v532
      %538 = vst.msk [vmem:[#allocation4] sm:$0xff] %vm411, %v537
      %539 = vst.msk [vmem:[#allocation2] sm:$0xff] %vm480, %v462
      %p540 = scmp.eq.s32.totalorder %s25, 1
      // Predicated region
      $region49: #{transformer_encoder_layer.4} parent=39 // pred_check
        %p541 = pneg %p540
      $region50: #{transformer_encoder_layer.4} parent=39 // pred_check_branch
        %543 = sbr.rel (%p541) target = $region52
      $region51: #{transformer_encoder_layer.4} parent=39 // pred_region
        %v544 = vld [vmem:[#allocation3] sm:$0xff]
        %v545 = vrcp.pop %v544
        %v546 = vld [vmem:[#allocation4] sm:$0xff]
        %548 = vset.pattern.permute.xlu0 0
        %549 = vperm.xlu0 %548, %v545
        %v550 = vpop.permute.xlu0 %549
        %v552 = vmul.f32 %v546, %v550
        %v553 = vpack.c.bf16 %v552, %v552
        %v554 = vld [vmem:[#allocation5] sm:$0xff]
        %v555 = vld [vmem:[%s382] sm:$0xf]
        %v557 = vsel %vm411, %v553, 0
        %v560 = vsel %vm493, %v555, 0
        %562 = vmatprep.subr.bf16.mxu0 0
        %563 = vmatpush1.bf16.msra.mxu0 0
        %564 = vmatprep.subr.bf16.mxu0 0
        %565 = vmatpush1.bf16.msra.mxu0 0
        %566 = vmatprep.subr.bf16.mxu0 0
        %567 = vmatpush1.bf16.msra.mxu0 0
        %568 = vmatprep.subr.bf16.mxu0 0
        %569 = vmatpush1.bf16.msra.mxu0 0
        %570 = vmatprep.subr.bf16.mxu0 0
        %571 = vmatpush1.bf16.msra.mxu0 0
        %572 = vmatprep.subr.bf16.mxu0 0
        %573 = vmatpush1.bf16.msra.mxu0 0
        %574 = vmatprep.subr.bf16.mxu0 0
        %575 = vmatpush1.bf16.msra.mxu0 0
        %576 = vmatprep.subr.bf16.mxu0 0
        %577 = vmatpush1.bf16.msra.mxu0 %v560
        %578 = vmatprep.subr.bf16.mxu0 0
        %579 = vmatpush2.bf16.msra.mxu0 0
        %580 = vmatprep.subr.bf16.mxu0 0
        %581 = vmatpush2.bf16.msra.mxu0 0
        %582 = vmatprep.subr.bf16.mxu0 0
        %583 = vmatpush2.bf16.msra.mxu0 0
        %584 = vmatprep.subr.bf16.mxu0 0
        %585 = vmatpush2.bf16.msra.mxu0 0
        %586 = vmatprep.subr.bf16.mxu0 0
        %587 = vmatpush2.bf16.msra.mxu0 0
        %588 = vmatprep.subr.bf16.mxu0 0
        %589 = vmatpush2.bf16.msra.mxu0 0
        %590 = vmatprep.subr.bf16.mxu0 0
        %591 = vmatpush2.bf16.msra.mxu0 0
        %592 = vmatprep.subr.bf16.mxu0 0
        %593 = vmatpush2.bf16.msra.mxu0 0
        %594 = vmatprep.mubr.bf16.mxu0 0
        %595 = vmatmul.mubr.bf16.gmra.mxu0 %v557
        %v596 = vpop.f32.mrf.mxu0
        %v597 = vadd.f32 0.0, %v596
        %v598 = vpop.f32.mrf.mxu0
        %v599 = vpop.f32.mrf.mxu0
        %v600 = vpop.f32.mrf.mxu0
        %601 = vdwg.mxu0
        %v602 = vadd.f32 %v554, %v597
        %vm603 = vcmask 261120
        %604 = vst.msk [vmem:[#allocation5] sm:$0xff] %vm603, %v602
      $region52: #{transformer_encoder_layer.4} parent=39 // pred_fallthru
        _
      %p605 = scmp.eq.s32.totalorder %s24, 3
      %p606 = pnand %p605, %p540
      %p607 = pneg %p606
      // Predicated region
      $region53: #{transformer_encoder_layer.4} parent=39 // pred_check
        _
      $region54: #{transformer_encoder_layer.4} parent=39 // pred_check_branch
        %609 = sbr.rel (%p606) target = $region56
      $region55: #{transformer_encoder_layer.4} parent=39 // pred_region
        %v610 = vld [vmem:[#allocation5] sm:$0xff]
        %v611 = vld [vmem:[%s4] sm:$0x1]
        %v613 = vlaneseq
        %v614 = vshrl.u32 %v613, 7
        %v615 = vsub.s32 0, %v614
        %v616 = vrot.slane %v611, %v615
        %v618 = vadd.f32 %v610, %v616
        %vm619 = vcmask 261120
        %620 = vst.msk [vmem:[%s390] sm:$0xff] %vm619, %v618
      $region56: #{transformer_encoder_layer.4} parent=39 // pred_fallthru
        _
      %p621 = scmp.lt.s32.totalorder %s22, 1
      %s622 = scalar_select %p621, %s22, 1
      %p623 = scmp.lt.s32.totalorder %s23, 1
      %s624 = scalar_select %p623, %s23, 1
      %s625 = smul.addr %s622, 2
      %s626 = sadd.s32 %s624, %s625
      %s627 = smul.addr %s626, 8
      %s628 = scalar_lea.vmem %s5, %s627
      // Predicated region
      $region57: #{transformer_encoder_layer.4} parent=39 // pred_check
        %p629 = pneg %p199
      $region58: #{transformer_encoder_layer.4} parent=39 // pred_check_branch
        %631 = sbr.rel (%p629) target = $region60
      $region59: #{transformer_encoder_layer.4} parent=39 // pred_region
        _
      $region60: #{transformer_encoder_layer.4} parent=39 // pred_fallthru
        _
    $region40: #{transformer_encoder_layer.4} parent=5 // pred_fallthru
      _
    %p632 = scmp.le.s32.totalorder 2, %s11
    // Predicated region
    $region61: #{transformer_encoder_layer.4} parent=5 // pred_check
      %p633 = pneg %p632
    $region62: #{transformer_encoder_layer.4} parent=5 // pred_check_branch
      %635 = sbr.rel (%p633) target = $region64
    $region63: #{transformer_encoder_layer.4} parent=5 // pred_region
      %s636 = ssub.s32 %s11, 2
      // Predicated region
      $region65: #{transformer_encoder_layer.4} parent=63 // pred_check
        %p637 = pneg %p205
      $region66: #{transformer_encoder_layer.4} parent=63 // pred_check_branch
        %639 = sbr.rel (%p637) target = $region68
      $region67: #{transformer_encoder_layer.4} parent=63 // pred_region
        %p640 = scmp.lt.s32.totalorder %s26, 1
        %s641 = scalar_select %p640, %s26, 1
        %p642 = scmp.lt.s32.totalorder %s27, 1
        %s643 = scalar_select %p642, %s27, 1
        %s644 = smul.addr %s641, 2
        %s645 = sadd.s32 %s643, %s644
        %s646 = smul.addr %s645, 8
        %s647 = scalar_lea.vmem %s5, %s646
      $region68: #{transformer_encoder_layer.4} parent=63 // pred_fallthru
        _
    $region64: #{transformer_encoder_layer.4} parent=5 // pred_fallthru
      _
  $region6: #{transformer_encoder_layer.4} parent=0 // loop_footer
    %s15 = sadd.s32 1, %s11
  $region7: #{transformer_encoder_layer.4} parent=0 // loop_footer_branch
    %10 = sbr.rel target = $region3
  $region8: #{transformer_encoder_layer.4} parent=0 // loop_exit
    _

// kernel: transformer_encoder_layer.5
$region0: #{transformer_encoder_layer.5}
  #allocation0 [shape = 'u32[]', space=smem, size = 0x4, offset = 0x4, fixed_abs, tag = 'smem constant byte address 0x4 - core index']
  #allocation1 [shape = 'u32[144,128]{1,0:T(1,128)}', space=vmem, size = 0x12000, scoped, tag = 'internal scratch']
  %s0 = inlined_call_operand.vmem [shape: f32[32,32], index: 0, kind: input, shape index: {}]
  %s1 = inlined_call_operand.vmem [shape: bf16[32,64], index: 1, kind: input, shape index: {}]
  %s2 = inlined_call_operand.vmem [shape: f32[1,64], index: 2, kind: input, shape index: {}]
  %s3 = inlined_call_operand.vmem [shape: bf16[64,32], index: 3, kind: input, shape index: {}]
  %s4 = inlined_call_operand.vmem [shape: f32[1,32], index: 4, kind: input, shape index: {}]
  %s5 = inlined_call_operand.vmem [shape: f32[1,32], index: 5, kind: input, shape index: {}]
  %s6 = inlined_call_operand.vmem [shape: f32[1,32], index: 6, kind: input, shape index: {}]
  %s7 = inlined_call_operand.hbm [shape: f32[32,32], index: 7, kind: output, shape index: {}]
  %s8 = sld [smem:[#allocation0]]
  $region61: #{transformer_encoder_layer.5} parent=0
    _
  %s10 = ssub.s32 1, %s8
  %s11 = scalar_select 0, %s10, %s8
  $region1: #{transformer_encoder_layer.5} parent=0
    #allocation2 [shape = 'u8[16384]{0}', space=vmem, size = 0x4000, scoped, tag = 'output window, operand 0']
    #allocation3 [shape = 's32[2]{0}', space=sflag, size = 0x8, scoped, tag = 'scoped memory for transformer_encoder_layer.5']
    %12 = vsyncpa [#allocation3], 0
    %s13 = scalar_lea.sflag [#allocation3], 1
    %14 = vsyncpa %s13, 0
    loop: start=0, step=1, limit=4
    $region2: #{transformer_encoder_layer.5} parent=1 // loop_pre_header
      _
    $region3: #{transformer_encoder_layer.5} parent=1 // loop_header
      %s16 = sphi 0, %s20
      %p17 = scmp.ge.s32.totalorder %s16, 4
      %s26 = sphi 0, %s28
      %s29 = sphi 0, %s26
      %s30 = sphi 0, %s29
      %s46 = sphi 0, %s30
      %s50 = sphi 0, %s50
      %s52 = sphi 0, %s50
      %s53 = sphi 0, %s52
      %s67 = sphi 0, %s53
      %s71 = sphi 0, %s71
      %s73 = sphi 0, %s71
      %s74 = sphi 0, %s73
      %s88 = sphi 0, %s74
      %s92 = sphi 0, %s92
      %s94 = sphi 0, %s92
      %s95 = sphi 0, %s94
      %s109 = sphi 0, %s95
      %s113 = sphi 0, %s113
      %s115 = sphi 0, %s113
      %s116 = sphi 0, %s115
      %s130 = sphi 0, %s116
      %s134 = sphi 0, %s134
      %s136 = sphi 0, %s134
      %s137 = sphi 0, %s136
      %s151 = sphi 0, %s137
      %s155 = sphi 0, %s155
      %s157 = sphi 0, %s155
      %s158 = sphi 0, %s157
      %s172 = sphi 0, %s158
      %s178 = sphi 0, %s180
      %s181 = sphi 0, %s178
      %s182 = sphi 0, %s181
      %s198 = sphi 0, %s182
    $region4: #{transformer_encoder_layer.5} parent=1 // loop_header_branch
      %19 = sbr.rel (%p17) target = $region8
    $region5: #{transformer_encoder_layer.5} parent=1 // loop_body
      %s21 = ssub.s32 %s16, 1
      %s22 = ssub.s32 %s16, 2
      %s23 = sadd.s32 %s16, 1
      %s24 = ssub.s32 %s16, %s23
      %p25 = scmp.eq.s32.totalorder %s24, 0
      %s27 = sadd.s32 %s26, 1
      %s28 = scalar_select %p25, %s26, %s27
      %p31 = pneg %p25
      %p32 = scmp.eq.s32.totalorder %s16, 1
      %p33 = por %p31, %p32
      %p34 = scmp.ne.s32.totalorder %s26, %s29
      %p35 = scmp.eq.s32.totalorder %s16, 0
      %p36 = por %p34, %p35
      %p37 = scmp.ne.s32.totalorder %s26, %s29
      %p38 = scmp.eq.s32.totalorder %s21, 1
      %p39 = por %p37, %p38
      %p40 = scmp.ne.s32.totalorder %s29, %s30
      %p41 = scmp.eq.s32.totalorder %s21, 0
      %p42 = por %p40, %p41
      %p43 = scmp.ne.s32.totalorder %s29, %s30
      %p44 = scmp.eq.s32.totalorder %s22, 1
      %p45 = por %p43, %p44
      %p47 = scmp.ne.s32.totalorder %s30, %s46
      %p48 = scmp.eq.s32.totalorder %s22, 0
      %p49 = por %p47, %p48
      %s51 = sadd.s32 %s50, 1
      %p54 = scmp.eq.s32.totalorder %s16, 1
      %p55 = scmp.ne.s32.totalorder %s50, %s52
      %p56 = scmp.eq.s32.totalorder %s16, 0
      %p57 = por %p55, %p56
      %p58 = scmp.ne.s32.totalorder %s50, %s52
      %p59 = scmp.eq.s32.totalorder %s21, 1
      %p60 = por %p58, %p59
      %p61 = scmp.ne.s32.totalorder %s52, %s53
      %p62 = scmp.eq.s32.totalorder %s21, 0
      %p63 = por %p61, %p62
      %p64 = scmp.ne.s32.totalorder %s52, %s53
      %p65 = scmp.eq.s32.totalorder %s22, 1
      %p66 = por %p64, %p65
      %p68 = scmp.ne.s32.totalorder %s53, %s67
      %p69 = scmp.eq.s32.totalorder %s22, 0
      %p70 = por %p68, %p69
      %s72 = sadd.s32 %s71, 1
      %p75 = scmp.eq.s32.totalorder %s16, 1
      %p76 = scmp.ne.s32.totalorder %s71, %s73
      %p77 = scmp.eq.s32.totalorder %s16, 0
      %p78 = por %p76, %p77
      %p79 = scmp.ne.s32.totalorder %s71, %s73
      %p80 = scmp.eq.s32.totalorder %s21, 1
      %p81 = por %p79, %p80
      %p82 = scmp.ne.s32.totalorder %s73, %s74
      %p83 = scmp.eq.s32.totalorder %s21, 0
      %p84 = por %p82, %p83
      %p85 = scmp.ne.s32.totalorder %s73, %s74
      %p86 = scmp.eq.s32.totalorder %s22, 1
      %p87 = por %p85, %p86
      %p89 = scmp.ne.s32.totalorder %s74, %s88
      %p90 = scmp.eq.s32.totalorder %s22, 0
      %p91 = por %p89, %p90
      %s93 = sadd.s32 %s92, 1
      %p96 = scmp.eq.s32.totalorder %s16, 1
      %p97 = scmp.ne.s32.totalorder %s92, %s94
      %p98 = scmp.eq.s32.totalorder %s16, 0
      %p99 = por %p97, %p98
      %p100 = scmp.ne.s32.totalorder %s92, %s94
      %p101 = scmp.eq.s32.totalorder %s21, 1
      %p102 = por %p100, %p101
      %p103 = scmp.ne.s32.totalorder %s94, %s95
      %p104 = scmp.eq.s32.totalorder %s21, 0
      %p105 = por %p103, %p104
      %p106 = scmp.ne.s32.totalorder %s94, %s95
      %p107 = scmp.eq.s32.totalorder %s22, 1
      %p108 = por %p106, %p107
      %p110 = scmp.ne.s32.totalorder %s95, %s109
      %p111 = scmp.eq.s32.totalorder %s22, 0
      %p112 = por %p110, %p111
      %s114 = sadd.s32 %s113, 1
      %p117 = scmp.eq.s32.totalorder %s16, 1
      %p118 = scmp.ne.s32.totalorder %s113, %s115
      %p119 = scmp.eq.s32.totalorder %s16, 0
      %p120 = por %p118, %p119
      %p121 = scmp.ne.s32.totalorder %s113, %s115
      %p122 = scmp.eq.s32.totalorder %s21, 1
      %p123 = por %p121, %p122
      %p124 = scmp.ne.s32.totalorder %s115, %s116
      %p125 = scmp.eq.s32.totalorder %s21, 0
      %p126 = por %p124, %p125
      %p127 = scmp.ne.s32.totalorder %s115, %s116
      %p128 = scmp.eq.s32.totalorder %s22, 1
      %p129 = por %p127, %p128
      %p131 = scmp.ne.s32.totalorder %s116, %s130
      %p132 = scmp.eq.s32.totalorder %s22, 0
      %p133 = por %p131, %p132
      %s135 = sadd.s32 %s134, 1
      %p138 = scmp.eq.s32.totalorder %s16, 1
      %p139 = scmp.ne.s32.totalorder %s134, %s136
      %p140 = scmp.eq.s32.totalorder %s16, 0
      %p141 = por %p139, %p140
      %p142 = scmp.ne.s32.totalorder %s134, %s136
      %p143 = scmp.eq.s32.totalorder %s21, 1
      %p144 = por %p142, %p143
      %p145 = scmp.ne.s32.totalorder %s136, %s137
      %p146 = scmp.eq.s32.totalorder %s21, 0
      %p147 = por %p145, %p146
      %p148 = scmp.ne.s32.totalorder %s136, %s137
      %p149 = scmp.eq.s32.totalorder %s22, 1
      %p150 = por %p148, %p149
      %p152 = scmp.ne.s32.totalorder %s137, %s151
      %p153 = scmp.eq.s32.totalorder %s22, 0
      %p154 = por %p152, %p153
      %s156 = sadd.s32 %s155, 1
      %p159 = scmp.eq.s32.totalorder %s16, 1
      %p160 = scmp.ne.s32.totalorder %s155, %s157
      %p161 = scmp.eq.s32.totalorder %s16, 0
      %p162 = por %p160, %p161
      %p163 = scmp.ne.s32.totalorder %s155, %s157
      %p164 = scmp.eq.s32.totalorder %s21, 1
      %p165 = por %p163, %p164
      %p166 = scmp.ne.s32.totalorder %s157, %s158
      %p167 = scmp.eq.s32.totalorder %s21, 0
      %p168 = por %p166, %p167
      %p169 = scmp.ne.s32.totalorder %s157, %s158
      %p170 = scmp.eq.s32.totalorder %s22, 1
      %p171 = por %p169, %p170
      %p173 = scmp.ne.s32.totalorder %s158, %s172
      %p174 = scmp.eq.s32.totalorder %s22, 0
      %p175 = por %p173, %p174
      %s176 = ssub.s32 %s16, %s23
      %p177 = scmp.eq.s32.totalorder %s176, 0
      %s179 = sadd.s32 %s178, 1
      %s180 = scalar_select %p177, %s178, %s179
      %p183 = pneg %p177
      %p184 = scmp.eq.s32.totalorder %s16, 1
      %p185 = por %p183, %p184
      %p186 = scmp.ne.s32.totalorder %s178, %s181
      %p187 = scmp.eq.s32.totalorder %s16, 0
      %p188 = por %p186, %p187
      %p189 = scmp.ne.s32.totalorder %s178, %s181
      %p190 = scmp.eq.s32.totalorder %s21, 1
      %p191 = por %p189, %p190
      %p192 = scmp.ne.s32.totalorder %s181, %s182
      %p193 = scmp.eq.s32.totalorder %s21, 0
      %p194 = por %p192, %p193
      %p195 = scmp.ne.s32.totalorder %s181, %s182
      %p196 = scmp.eq.s32.totalorder %s22, 1
      %p197 = por %p195, %p196
      %p199 = scmp.ne.s32.totalorder %s182, %s198
      %p200 = scmp.eq.s32.totalorder %s22, 0
      %p201 = por %p199, %p200
      %p202 = scmp.le.s32.totalorder 1, %s16
      %p203 = scmp.lt.s32.totalorder %s16, 3
      %p204 = pnand %p202, %p203
      %p205 = pneg %p204
      // Predicated region
      $region9: #{transformer_encoder_layer.5} parent=5 // pred_check
        _
      $region10: #{transformer_encoder_layer.5} parent=5 // pred_check_branch
        %207 = sbr.rel (%p204) target = $region12
      $region11: #{transformer_encoder_layer.5} parent=5 // pred_region
        %s208 = ssub.s32 %s16, 1
        // Predicated region
        $region13: #{transformer_encoder_layer.5} parent=11 // pred_check
          %p209 = pneg %p63
        $region14: #{transformer_encoder_layer.5} parent=11 // pred_check_branch
          %211 = sbr.rel (%p209) target = $region16
        $region15: #{transformer_encoder_layer.5} parent=11 // pred_region
          _
        $region16: #{transformer_encoder_layer.5} parent=11 // pred_fallthru
          _
        // Predicated region
        $region17: #{transformer_encoder_layer.5} parent=11 // pred_check
          %p212 = pneg %p84
        $region18: #{transformer_encoder_layer.5} parent=11 // pred_check_branch
          %214 = sbr.rel (%p212) target = $region20
        $region19: #{transformer_encoder_layer.5} parent=11 // pred_region
          _
        $region20: #{transformer_encoder_layer.5} parent=11 // pred_fallthru
          _
        // Predicated region
        $region21: #{transformer_encoder_layer.5} parent=11 // pred_check
          %p215 = pneg %p105
        $region22: #{transformer_encoder_layer.5} parent=11 // pred_check_branch
          %217 = sbr.rel (%p215) target = $region24
        $region23: #{transformer_encoder_layer.5} parent=11 // pred_region
          _
        $region24: #{transformer_encoder_layer.5} parent=11 // pred_fallthru
          _
        // Predicated region
        $region25: #{transformer_encoder_layer.5} parent=11 // pred_check
          %p218 = pneg %p126
        $region26: #{transformer_encoder_layer.5} parent=11 // pred_check_branch
          %220 = sbr.rel (%p218) target = $region28
        $region27: #{transformer_encoder_layer.5} parent=11 // pred_region
          _
        $region28: #{transformer_encoder_layer.5} parent=11 // pred_fallthru
          _
        // Predicated region
        $region29: #{transformer_encoder_layer.5} parent=11 // pred_check
          %p221 = pneg %p147
        $region30: #{transformer_encoder_layer.5} parent=11 // pred_check_branch
          %223 = sbr.rel (%p221) target = $region32
        $region31: #{transformer_encoder_layer.5} parent=11 // pred_region
          _
        $region32: #{transformer_encoder_layer.5} parent=11 // pred_fallthru
          _
        // Predicated region
        $region33: #{transformer_encoder_layer.5} parent=11 // pred_check
          %p224 = pneg %p168
        $region34: #{transformer_encoder_layer.5} parent=11 // pred_check_branch
          %226 = sbr.rel (%p224) target = $region36
        $region35: #{transformer_encoder_layer.5} parent=11 // pred_region
          _
        $region36: #{transformer_encoder_layer.5} parent=11 // pred_fallthru
          _
      $region12: #{transformer_encoder_layer.5} parent=5 // pred_fallthru
        _
      %p227 = scmp.lt.s32.totalorder %s16, 2
      // Predicated region
      $region37: #{transformer_encoder_layer.5} parent=5 // pred_check
        %p228 = pneg %p227
      $region38: #{transformer_encoder_layer.5} parent=5 // pred_check_branch
        %230 = sbr.rel (%p228) target = $region40
      $region39: #{transformer_encoder_layer.5} parent=5 // pred_region
        // Predicated region
        $region41: #{transformer_encoder_layer.5} parent=39 // pred_check
          %p231 = pneg %p36
        $region42: #{transformer_encoder_layer.5} parent=39 // pred_check_branch
          %233 = sbr.rel (%p231) target = $region44
        $region43: #{transformer_encoder_layer.5} parent=39 // pred_region
          %s234 = smul.u32 2, %s16
          %p235 = scmp.lt.s32.totalorder %s234, 3
          %s236 = scalar_select %p235, %s234, 3
          %s237 = smul.addr %s236, 8
          %s238 = scalar_lea.vmem %s0, %s237
          %s239 = smul.u32 2, %s16
        $region44: #{transformer_encoder_layer.5} parent=39 // pred_fallthru
          _
      $region40: #{transformer_encoder_layer.5} parent=5 // pred_fallthru
        _
      %p240 = scmp.le.s32.totalorder 1, %s16
      %p241 = scmp.lt.s32.totalorder %s16, 3
      %p242 = pnand %p240, %p241
      %p243 = pneg %p242
      // Predicated region
      $region45: #{transformer_encoder_layer.5} parent=5 // pred_check
        _
      $region46: #{transformer_encoder_layer.5} parent=5 // pred_check_branch
        %245 = sbr.rel (%p242) target = $region48
      $region47: #{transformer_encoder_layer.5} parent=5 // pred_region
        %s246 = ssub.s32 %s16, 1
        %s247 = smul.u32 2, %s21
        %p248 = scmp.lt.s32.totalorder %s247, 3
        %s249 = scalar_select %p248, %s247, 3
        %s250 = smul.addr %s249, 8
        %s251 = scalar_lea.vmem %s0, %s250
        %p252 = pneg %p42
        %p253 = pneg %p39
        %p254 = pneg %p63
        %p255 = pneg %p60
        %p256 = pneg %p84
        %p257 = pneg %p81
        %p258 = pneg %p105
        %p259 = pneg %p102
        %p260 = pneg %p126
        %p261 = pneg %p123
        %p262 = pneg %p147
        %p263 = pneg %p144
        %p264 = pneg %p168
        %p265 = pneg %p165
        %p266 = pneg %p194
        %p267 = pneg %p191
        %s268 = sand.u32 %s181, 1
        %s269 = scalar_lea.sflag [#allocation3], %s268
        %s270 = sand.u32 %s181, 1
        %s271 = smul.addr %s270, 16
        %s272 = scalar_lea.vmem [#allocation2], %s271
        %s273 = smul.u32 2, %s21
        %p274 = scmp.lt.s32.totalorder %s273, 3
        %s275 = scalar_select %p274, %s273, 3
        %s276 = smul.addr %s275, 8
        %s277 = scalar_lea.vmem %s0, %s276
        %s278 = smul.u32 2, %s21
        %s279 = smul.u32 2, %s21
        %v281 = vld [vmem:[%s277] sm:$0xff]
        %v282 = vld [vmem:[%s277 + $0x8] sm:$0xff]
        %v283 = vpack.c.bf16 %v282, %v281
        %v284 = vld [vmem:[%s1] sm:$0xf]
        %v285 = vld [vmem:[%s1 + $0x4] sm:$0xf]
        %v286 = vld [vmem:[%s1 + $0x8] sm:$0xf]
        %v287 = vld [vmem:[%s1 + $0xc] sm:$0xf]
        %v288 = vld [vmem:[%s2] sm:$0x1]
        %v290 = vlaneseq
        %v291 = vshrl.u32 %v290, 7
        %v292 = vsub.s32 0, %v291
        %v293 = vrot.slane %v288, %v292
        %v299 = vunpack.c.l.b16 %v284
        %v300 = vunpack.c.l.b16 %v285
        %v301 = vunpack.c.l.b16 %v286
        %v302 = vunpack.c.l.b16 %v287
        %v303 = vpack.c.b16 %v300, %v299
        %v304 = vpack.c.b16 %v302, %v301
        %vm307 = vcmask 261120
        %v309 = vsel %vm307, %v283, 0
        %311 = vmatprep.subr.bf16.mxu0 0
        %312 = vmatpush1.bf16.msra.mxu0 0
        %313 = vmatprep.subr.bf16.mxu0 0
        %314 = vmatpush1.bf16.msra.mxu0 0
        %315 = vmatprep.subr.bf16.mxu0 0
        %316 = vmatpush1.bf16.msra.mxu0 0
        %317 = vmatprep.subr.bf16.mxu0 0
        %318 = vmatpush1.bf16.msra.mxu0 0
        %319 = vmatprep.subr.bf16.mxu0 0
        %320 = vmatpush1.bf16.msra.mxu0 0
        %321 = vmatprep.subr.bf16.mxu0 0
        %322 = vmatpush1.bf16.msra.mxu0 0
        %323 = vmatprep.subr.bf16.mxu0 0
        %324 = vmatpush1.bf16.msra.mxu0 %v304
        %325 = vmatprep.subr.bf16.mxu0 0
        %326 = vmatpush1.bf16.msra.mxu0 %v303
        %327 = vmatprep.subr.bf16.mxu0 0
        %328 = vmatpush2.bf16.msra.mxu0 0
        %329 = vmatprep.subr.bf16.mxu0 0
        %330 = vmatpush2.bf16.msra.mxu0 0
        %331 = vmatprep.subr.bf16.mxu0 0
        %332 = vmatpush2.bf16.msra.mxu0 0
        %333 = vmatprep.subr.bf16.mxu0 0
        %334 = vmatpush2.bf16.msra.mxu0 0
        %335 = vmatprep.subr.bf16.mxu0 0
        %336 = vmatpush2.bf16.msra.mxu0 0
        %337 = vmatprep.subr.bf16.mxu0 0
        %338 = vmatpush2.bf16.msra.mxu0 0
        %339 = vmatprep.subr.bf16.mxu0 0
        %340 = vmatpush2.bf16.msra.mxu0 0
        %341 = vmatprep.subr.bf16.mxu0 0
        %342 = vmatpush2.bf16.msra.mxu0 0
        %343 = vmatprep.mubr.bf16.mxu0 0
        %344 = vmatmul.mubr.bf16.gmra.mxu0 %v309
        %v345 = vpop.f32.mrf.mxu0
        %v346 = vadd.f32 %v293, %v345
        %v347 = vpop.f32.mrf.mxu0
        %v348 = vpop.f32.mrf.mxu0
        %v349 = vadd.f32 %v293, %v348
        %v350 = vpop.f32.mrf.mxu0
        %351 = vdwg.mxu0
        %v352 = vmax.f32 %v346, 0.0
        %v353 = vmax.f32 %v349, 0.0
        %v354 = vpack.c.bf16 %v353, %v352
        %v355 = vld [vmem:[%s3] sm:$0xf]
        %v356 = vld [vmem:[%s3 + $0x4] sm:$0xf]
        %v357 = vld [vmem:[%s3 + $0x8] sm:$0xf]
        %v358 = vld [vmem:[%s3 + $0xc] sm:$0xf]
        %v359 = vld [vmem:[%s3 + $0x10] sm:$0xf]
        %v360 = vld [vmem:[%s3 + $0x14] sm:$0xf]
        %v361 = vld [vmem:[%s3 + $0x18] sm:$0xf]
        %v362 = vld [vmem:[%s3 + $0x1c] sm:$0xf]
        %v363 = vld [vmem:[%s4] sm:$0x1]
        %v365 = vlaneseq
        %v366 = vshrl.u32 %v365, 7
        %v367 = vsub.s32 0, %v366
        %v368 = vrot.slane %v363, %v367
        %v378 = vunpack.c.l.b16 %v355
        %v379 = vunpack.c.l.b16 %v356
        %v380 = vunpack.c.l.b16 %v357
        %v381 = vunpack.c.l.b16 %v358
        %v382 = vunpack.c.l.b16 %v359
        %v383 = vunpack.c.l.b16 %v360
        %v384 = vunpack.c.l.b16 %v361
        %v385 = vunpack.c.l.b16 %v362
        %v386 = vpack.c.b16 %v379, %v378
        %v387 = vpack.c.b16 %v381, %v380
        %v388 = vpack.c.b16 %v383, %v382
        %v389 = vpack.c.b16 %v385, %v384
        %vm394 = vcmask 523264
        %v396 = vsel %vm394, %v354, 0
        %398 = vmatprep.subr.bf16.mxu0 0
        %399 = vmatpush1.bf16.msra.mxu0 0
        %400 = vmatprep.subr.bf16.mxu0 0
        %401 = vmatpush1.bf16.msra.mxu0 0
        %402 = vmatprep.subr.bf16.mxu0 0
        %403 = vmatpush1.bf16.msra.mxu0 0
        %404 = vmatprep.subr.bf16.mxu0 0
        %405 = vmatpush1.bf16.msra.mxu0 0
        %406 = vmatprep.subr.bf16.mxu0 0
        %407 = vmatpush1.bf16.msra.mxu0 %v389
        %408 = vmatprep.subr.bf16.mxu0 0
        %409 = vmatpush1.bf16.msra.mxu0 %v388
        %410 = vmatprep.subr.bf16.mxu0 0
        %411 = vmatpush1.bf16.msra.mxu0 %v387
        %412 = vmatprep.subr.bf16.mxu0 0
        %413 = vmatpush1.bf16.msra.mxu0 %v386
        %414 = vmatprep.subr.bf16.mxu0 0
        %415 = vmatpush2.bf16.msra.mxu0 0
        %416 = vmatprep.subr.bf16.mxu0 0
        %417 = vmatpush2.bf16.msra.mxu0 0
        %418 = vmatprep.subr.bf16.mxu0 0
        %419 = vmatpush2.bf16.msra.mxu0 0
        %420 = vmatprep.subr.bf16.mxu0 0
        %421 = vmatpush2.bf16.msra.mxu0 0
        %422 = vmatprep.subr.bf16.mxu0 0
        %423 = vmatpush2.bf16.msra.mxu0 0
        %424 = vmatprep.subr.bf16.mxu0 0
        %425 = vmatpush2.bf16.msra.mxu0 0
        %426 = vmatprep.subr.bf16.mxu0 0
        %427 = vmatpush2.bf16.msra.mxu0 0
        %428 = vmatprep.subr.bf16.mxu0 0
        %429 = vmatpush2.bf16.msra.mxu0 0
        %430 = vmatprep.mubr.bf16.mxu0 0
        %431 = vmatmul.mubr.bf16.gmra.mxu0 %v396
        %v432 = vpop.f32.mrf.mxu0
        %v433 = vadd.f32 %v368, %v432
        %v434 = vpop.f32.mrf.mxu0
        %v435 = vpop.f32.mrf.mxu0
        %v436 = vadd.f32 %v368, %v435
        %v437 = vpop.f32.mrf.mxu0
        %438 = vdwg.mxu0
        %v439 = vadd.f32 %v433, %v281
        %v440 = vadd.f32 %v436, %v282
        %v441 = vsel %vm307, %v439, 0.0
        %442 = vadd.xlane.f32.xlu0 %v441
        %v443 = vpop.xlane.xlu0 %442
        %v444 = vsel %vm307, %v440, 0.0
        %445 = vadd.xlane.f32.xlu0 %v444
        %v446 = vpop.xlane.xlu0 %445
        %v447 = vrcp.pop 32.0
        %v448 = vmul.f32 %v443, %v447
        %v449 = vmul.f32 %v446, %v447
        %v450 = vsub.f32 %v439, %v448
        %v451 = vsub.f32 %v440, %v449
        %v452 = vmul.f32 %v450, %v450
        %v453 = vmul.f32 %v451, %v451
        %v454 = vsel %vm307, %v452, 0.0
        %455 = vadd.xlane.f32.xlu0 %v454
        %v456 = vpop.xlane.xlu0 %455
        %v457 = vsel %vm307, %v453, 0.0
        %458 = vadd.xlane.f32.xlu0 %v457
        %v459 = vpop.xlane.xlu0 %458
        %v460 = vmul.f32 %v456, %v447
        %v461 = vmul.f32 %v459, %v447
        %v462 = vadd.f32 %v460, 1e-05
        %v463 = vadd.f32 %v461, 1e-05
        %v464 = vrsqrt.pop %v462
        %v465 = vrsqrt.pop %v463
        %v466 = vmul.f32 %v450, %v464
        %v467 = vmul.f32 %v451, %v465
        %v468 = vld [vmem:[%s5] sm:$0x1]
        %v470 = vlaneseq
        %v471 = vshrl.u32 %v470, 7
        %v472 = vsub.s32 0, %v471
        %v473 = vrot.slane %v468, %v472
        %v475 = vmul.f32 %v466, %v473
        %v476 = vmul.f32 %v467, %v473
        %v477 = vld [vmem:[%s6] sm:$0x1]
        %v479 = vlaneseq
        %v480 = vshrl.u32 %v479, 7
        %v481 = vsub.s32 0, %v480
        %v482 = vrot.slane %v477, %v481
        %v484 = vadd.f32 %v475, %v482
        %v485 = vadd.f32 %v476, %v482
        %486 = vst.msk [vmem:[%s272] sm:$0xff] %vm307, %v484
        %487 = vst.msk [vmem:[%s272 + $0x8] sm:$0xff] %vm307, %v485
        %s488 = sand.u32 %s181, 1
        %s489 = scalar_lea.sflag [#allocation3], %s488
        %s490 = sand.u32 %s181, 1
        %s491 = smul.addr %s490, 16
        %s492 = scalar_lea.vmem [#allocation2], %s491
        // Predicated region
        $region49: #{transformer_encoder_layer.5} parent=47 // pred_check
          %p493 = pneg %p191
        $region50: #{transformer_encoder_layer.5} parent=47 // pred_check_branch
          %495 = sbr.rel (%p493) target = $region52
        $region51: #{transformer_encoder_layer.5} parent=47 // pred_region
          %s496 = smul.u32 2, %s21
          %s498 = ssub.s32 256, 256
          %499 = vsyncadd %s489, %s498
          %s500 = smul.addr %s496, 128
          %s501 = scalar_lea.hbm %s7, %s500
          %s502 = sshll.u32 %s492, 4
          %s503 = int_to_ptr.vmem [resolvable:$true] %s502
          %508 = dma.vmem_to_hbm [thread:$0]  %s503, 256, %s501, %s489, 128, 128, 8
        $region52: #{transformer_encoder_layer.5} parent=47 // pred_fallthru
          _
      $region48: #{transformer_encoder_layer.5} parent=5 // pred_fallthru
        _
      %p509 = scmp.le.s32.totalorder 2, %s16
      // Predicated region
      $region53: #{transformer_encoder_layer.5} parent=5 // pred_check
        %p510 = pneg %p509
      $region54: #{transformer_encoder_layer.5} parent=5 // pred_check_branch
        %512 = sbr.rel (%p510) target = $region56
      $region55: #{transformer_encoder_layer.5} parent=5 // pred_region
        %s513 = ssub.s32 %s16, 2
        // Predicated region
        $region57: #{transformer_encoder_layer.5} parent=55 // pred_check
          %p514 = pneg %p197
        $region58: #{transformer_encoder_layer.5} parent=55 // pred_check_branch
          %516 = sbr.rel (%p514) target = $region60
        $region59: #{transformer_encoder_layer.5} parent=55 // pred_region
          %s517 = sand.u32 %s182, 1
          %s518 = scalar_lea.sflag [#allocation3], %s517
          %s519 = sand.u32 %s182, 1
          %s520 = smul.addr %s519, 16
          %s521 = scalar_lea.vmem [#allocation2], %s520
          %522 = dma.done %s518, 256
        $region60: #{transformer_encoder_layer.5} parent=55 // pred_fallthru
          _
      $region56: #{transformer_encoder_layer.5} parent=5 // pred_fallthru
        _
    $region6: #{transformer_encoder_layer.5} parent=1 // loop_footer
      %s20 = sadd.s32 1, %s16
    $region7: #{transformer_encoder_layer.5} parent=1 // loop_footer_branch
      %15 = sbr.rel target = $region3
    $region8: #{transformer_encoder_layer.5} parent=1 // loop_exit
      _
    %523 = vsyncpa [#allocation3], 1
    %s524 = scalar_lea.sflag [#allocation3], 1
    %525 = vsyncpa %s524, 1

</llo_original>
